<compile_context>
chip_gen: v7x
topology: tpu7x:2x2x1
jax: 0.10.0
libtpu: 0.0.40
codegen_flags: <defaults>
</compile_context>

<pallas_src>
import functools

import jax
import jax.numpy as jnp
from jax import lax
from jax.experimental import pallas as pl
from jax.experimental.pallas import tpu as pltpu

_LANE = 128
_SUB = 8


def _round_up(x, m):
    return (x + m - 1) // m * m


def _choose_tile(padded, unit, cap):
    """Largest multiple of `unit` that divides `padded` and is <= cap (>= unit)."""
    n = padded // unit
    cap_units = max(1, cap // unit)
    best = 1
    d = 1
    while d * d <= n:
        if n % d == 0:
            if d <= cap_units:
                best = max(best, d)
            q = n // d
            if q <= cap_units:
                best = max(best, q)
        d += 1
    return best * unit


def _pick_tiles_small_e(Q8, S128, E):
    """Small-E path tiles: ts lane-dense divisor of S128, tq divisor of Q8.

    Per-step tanh work ~<= 4M elems; q-chunk keeps the f32 accumulator within
    ~16 vregs; (chunks x E) unrolled iterations bounded at ~512.
    """
    ts = _choose_tile(S128, _LANE, min(1024, S128))
    qc = max(_SUB, min(32, (16384 // ts) // _SUB * _SUB))
    max_chunks = max(1, 512 // max(E, 1))
    budget_tq = max(_SUB, ((4 * 1024 * 1024) // max(ts * E, 1)) // _SUB * _SUB)
    tq_cap = min(Q8, 512, max_chunks * qc, budget_tq)
    tq = _choose_tile(Q8, _SUB, max(_SUB, tq_cap))
    qc = min(qc, tq)
    return tq, ts, qc


def _pick_tiles_wide_e(Q8, S128, E, use_bf16):
    """Wide-E path tiles: bound the (tq, ts, E) intermediate (bf16 gets 2x)."""
    budget = (2 if use_bf16 else 1) * 1024 * 1024    # elements of tq*ts*E
    ts_cap = max(_LANE, min(512, (budget // max(E * 16, 1)) // _LANE * _LANE))
    ts = _choose_tile(S128, _LANE, min(ts_cap, S128))
    tq_cap = max(_SUB, (budget // max(ts * E, 1)) // _SUB * _SUB)
    tq = _choose_tile(Q8, _SUB, max(_SUB, min(Q8, 256, tq_cap)))
    return tq, ts


def _fuse_kernel_small_e(q_ref, k_ref, wq_ref, wk_ref, wb_ref, vw_ref, vb_ref,
                         kmask_ref, qmask_ref, out_ref, qp_ref, kp_ref, *,
                         q_chunk):
    """E <= 128: keep S on the lane axis for all heavy elementwise work.

    Per grid step (one (batch, s-tile, q-tile)):
      q_ref: (1, tq, E)      k_ref: (1, ts, K)
      wq_ref: (E, E)=Wq^T    wk_ref: (E, K)=Wk    wb_ref: (1, E)
      vw_ref: SMEM (E,)      vb_ref: SMEM (1,)
      kmask_ref: (1, 1, ts)  qmask_ref: (1, tq, 1)   (int32)
      out_ref: (1, tq, ts)
      qp_ref: VMEM (tq, E)   kp_ref: VMEM (E, ts)    (bf16 on v6e/v7x, f32 v5e)
    """
    E = wq_ref.shape[0]
    tq, ts = out_ref.shape[1], out_ref.shape[2]

    # Split-linear projections on the MXU (negligible FLOPs).  kp^T = Wk @ key^T
    # keeps S on lanes; the in-kernel contraction over K replaces the old
    # host-side key transpose.  Recomputed per step (cheap) so megacore grid
    # splits along any axis stay correct.
    kp = lax.dot_general(wk_ref[...], k_ref[0],
                         dimension_numbers=(((1,), (1,)), ((), ())),
                         preferred_element_type=jnp.float32)           # (E, ts)
    kp_ref[...] = kp.astype(kp_ref.dtype)
    qp = jnp.dot(q_ref[0], wq_ref[...],
                 preferred_element_type=jnp.float32) + wb_ref[...]     # (tq, E)
    qp_ref[...] = qp.astype(qp_ref.dtype)

    kmask = kmask_ref[0] != 0                                          # (1, ts)
    vb = vb_ref[0]

    # Chunked, statically-unrolled reduction over the embedding axis: every
    # tanh/mul/add runs on fully lane-dense (qc, ts) tiles; the add + tanh are
    # bf16 on bf16-capable EUPs, the scalar-weighted accumulation stays f32 and
    # fits in vregs per chunk.
    c = 0
    while c < tq:
        qc = min(q_chunk, tq - c)
        acc = jnp.zeros((qc, ts), jnp.float32)
        for e in range(E):
            qcol = qp_ref[pl.ds(c, qc), pl.ds(e, 1)]        # (qc, 1) -> lanes
            krow = kp_ref[pl.ds(e, 1), :]                   # (1, ts) -> sublanes
            th = jnp.tanh(qcol + krow).astype(jnp.float32)  # (qc, ts)
            acc = acc + vw_ref[e] * th
        score = acc + vb
        # Masks: key mask -> -1e25 first, query mask -> 0 last (query wins).
        score = jnp.where(kmask, jnp.float32(-1e25), score)
        qmask = qmask_ref[0, pl.ds(c, qc)] != 0              # (qc, 1)
        score = jnp.where(qmask, jnp.float32(0.0), score)
        out_ref[0, pl.ds(c, qc), :] = score
        c += qc


def _fuse_kernel_wide_e(q_ref, k_ref, wq_ref, wkt_ref, wb_ref, vw_ref, vb_ref,
                        kmask_ref, qmask_ref, out_ref, *, compute_dtype):
    """E >= 128: E fills the lane axis; broadcast/tanh/mul in compute_dtype,
    sum accumulated in f32."""
    cd = compute_dtype
    kp = jnp.dot(k_ref[0].astype(cd), wkt_ref[...],
                 preferred_element_type=jnp.float32)                    # (ts, E)
    qp = jnp.dot(q_ref[0].astype(cd), wq_ref[...],
                 preferred_element_type=jnp.float32) + wb_ref[...]      # (tq, E)
    kp = kp.astype(cd)
    qp = qp.astype(cd)
    h = qp[:, None, :] + kp[None, :, :]                                 # (tq,ts,E)
    th = jnp.tanh(h)
    vw = vw_ref[...]                                                    # (1, E) cd
    score = jnp.sum(th * vw[None, :, :], axis=-1,
                    dtype=jnp.float32) + vb_ref[0]                      # (tq, ts)
    score = jnp.where(kmask_ref[0] != 0, jnp.float32(-1e25), score)
    score = jnp.where(qmask_ref[0] != 0, jnp.float32(0.0), score)
    out_ref[0] = score


@functools.partial(jax.jit, static_argnames=("use_bf16",))
def _mask_aware_ssn_fuse_impl(query, key, w_weight, w_bias, v_weight, v_bias,
                              key_padding_mask, query_padding_mask, *, use_bf16):
    B, Q, E = query.shape
    _, S, K = key.shape
    f32 = jnp.float32
    cdtype = jnp.bfloat16 if use_bf16 else jnp.float32

    # Minimal padding: keeps compute & output writeback proportional to the
    # real problem (tiles are chosen as divisors of the padded extents).
    Q8 = _round_up(Q, _SUB)
    S128 = _round_up(S, _LANE)

    query_p = jnp.pad(query.astype(f32), ((0, 0), (0, Q8 - Q), (0, 0)))
    key_p = jnp.pad(key.astype(f32), ((0, 0), (0, S128 - S), (0, 0)))
    kmask = jnp.pad(key_padding_mask.astype(jnp.int32),
                    ((0, 0), (0, S128 - S)))[:, None, :]            # (B,1,S128)
    qmask = jnp.pad(query_padding_mask.astype(jnp.int32),
                    ((0, 0), (0, Q8 - Q)))[:, :, None]              # (B,Q8,1)

    # Split the concatenated-input Linear into its key-part and query-part.
    wq_t = w_weight[:, K:].T.astype(f32)          # (E, E)
    wb = w_bias.reshape(1, E).astype(f32)         # (1, E)
    vb = v_bias.reshape(1).astype(f32)            # (1,) -> SMEM scalar

    cparams = pltpu.CompilerParams(
        dimension_semantics=("parallel", "parallel", "parallel"),
        vmem_limit_bytes=32 * 1024 * 1024)
    out_shape = jax.ShapeDtypeStruct((B, Q8, S128), f32)

    if E <= _LANE:
        # --- S-on-lanes path (E does not fill the lane axis) ---
        tq, ts, qc = _pick_tiles_small_e(Q8, S128, E)
        grid = (B, S128 // ts, Q8 // tq)          # q-tile innermost: key resident
        wk = w_weight[:, :K].astype(f32)          # (E, K)
        vw = v_weight.reshape(E).astype(f32)      # (E,) -> SMEM
        grid_spec = pltpu.PrefetchScalarGridSpec(
            num_scalar_prefetch=0, grid=grid,
            in_specs=[
                pl.BlockSpec((1, tq, E), lambda b, si, qi: (b, qi, 0)),   # query
                pl.BlockSpec((1, ts, K), lambda b, si, qi: (b, si, 0)),   # key
                pl.BlockSpec((E, E), lambda b, si, qi: (0, 0)),           # Wq^T
                pl.BlockSpec((E, K), lambda b, si, qi: (0, 0)),           # Wk
                pl.BlockSpec((1, E), lambda b, si, qi: (0, 0)),           # W bias
                pl.BlockSpec(memory_space=pltpu.MemorySpace.SMEM),        # v weight
                pl.BlockSpec(memory_space=pltpu.MemorySpace.SMEM),        # v bias
                pl.BlockSpec((1, 1, ts), lambda b, si, qi: (b, 0, si)),   # key mask
                pl.BlockSpec((1, tq, 1), lambda b, si, qi: (b, qi, 0)),   # query mask
            ],
            out_specs=pl.BlockSpec((1, tq, ts), lambda b, si, qi: (b, qi, si)),
            scratch_shapes=[pltpu.VMEM((tq, E), cdtype),   # qp
                            pltpu.VMEM((E, ts), cdtype)])  # kp^T
        kernel = functools.partial(_fuse_kernel_small_e, q_chunk=qc)
        out = pl.pallas_call(kernel, out_shape=out_shape, grid_spec=grid_spec,
                             compiler_params=cparams)(
            query_p, key_p, wq_t, wk, wb, vw, vb, kmask, qmask)
    else:
        # --- E-on-lanes path (E >= 128 is already lane-dense) ---
        tq, ts = _pick_tiles_wide_e(Q8, S128, E, use_bf16)
        grid = (B, S128 // ts, Q8 // tq)
        wq_c = wq_t.astype(cdtype)                 # (E, E)
        wkt = w_weight[:, :K].T.astype(cdtype)     # (K, E)
        vw = v_weight.reshape(1, E).astype(cdtype) # (1, E)
        grid_spec = pltpu.PrefetchScalarGridSpec(
            num_scalar_prefetch=0, grid=grid,
            in_specs=[
                pl.BlockSpec((1, tq, E), lambda b, si, qi: (b, qi, 0)),   # query
                pl.BlockSpec((1, ts, K), lambda b, si, qi: (b, si, 0)),   # key
                pl.BlockSpec((E, E), lambda b, si, qi: (0, 0)),           # Wq^T
                pl.BlockSpec((K, E), lambda b, si, qi: (0, 0)),           # Wk^T
                pl.BlockSpec((1, E), lambda b, si, qi: (0, 0)),           # W bias
                pl.BlockSpec((1, E), lambda b, si, qi: (0, 0)),           # v weight
                pl.BlockSpec(memory_space=pltpu.MemorySpace.SMEM),        # v bias
                pl.BlockSpec((1, 1, ts), lambda b, si, qi: (b, 0, si)),   # key mask
                pl.BlockSpec((1, tq, 1), lambda b, si, qi: (b, qi, 0)),   # query mask
            ],
            out_specs=pl.BlockSpec((1, tq, ts), lambda b, si, qi: (b, qi, si)))
        kernel = functools.partial(_fuse_kernel_wide_e, compute_dtype=cdtype)
        out = pl.pallas_call(kernel, out_shape=out_shape, grid_spec=grid_spec,
                             compiler_params=cparams)(
            query_p, key_p, wq_c, wkt, wb, vw, vb, kmask, qmask)

    return out[:, :Q, :S]


def mask_aware_ssn_fuse(query, key, w_weight, w_bias, v_weight, v_bias,
                        key_padding_mask, query_padding_mask, *, use_bf16=None):
    """Pallas implementation of MaskAwareSSNFuse.forward.

    query: (B, Q, E) f32, key: (B, S, K) f32
    w_weight: (E, K+E) f32 (torch Linear weight), w_bias: (E,)
    v_weight: (1, E) f32, v_bias: (1,)
    key_padding_mask: (B, S) bool, query_padding_mask: (B, Q) bool
    use_bf16: explicit flag for bf16 tanh/add path (None -> derive from device;
              only enabled on bf16-capable VPU/EUP generations, v6e/v7x).
    returns: (B, Q, S) f32
    """
    if use_bf16 is None:
        kind = jax.devices()[0].device_kind.lower()
        use_bf16 = any(t in kind for t in ("v6", "v7"))
    return _mask_aware_ssn_fuse_impl(query, key, w_weight, w_bias, v_weight,
                                     v_bias, key_padding_mask,
                                     query_padding_mask, use_bf16=bool(use_bf16))


def _reference(query, key, w_weight, w_bias, v_weight, v_bias, kmask, qmask):
    """Plain-JAX reference mirroring the PyTorch forward (for verification)."""
    B, Q, E = query.shape
    _, S, K = key.shape
    key_embed = jnp.broadcast_to(key[:, None, :, :], (B, Q, S, K))
    query_embed = jnp.broadcast_to(query[:, :, None, :], (B, Q, S, E))
    fuse = jnp.concatenate([key_embed, query_embed], axis=-1)        # (B,Q,S,K+E)
    x = jnp.einsum('bqsf,ef->bqse', fuse, w_weight) + w_bias
    x = jnp.einsum('bqse,oe->bqso', jnp.tanh(x), v_weight)[..., 0] + v_bias[0]
    x = jnp.where(kmask[:, None, :], -1e25, x)
    x = jnp.where(qmask[:, :, None], 0.0, x)
    return x


if __name__ == "__main__":
    B, Q, S, E = 2, 8, 16, 32
    K = E  # kdim=None -> kdim = embed_dim

    root = jax.random.PRNGKey(0)
    kq, kk, kw, kwb, kv, kvb, kkm, kqm = jax.random.split(root, 8)

    query = jax.random.normal(kq, (B, Q, E), dtype=jnp.float32)
    key = jax.random.normal(kk, (B, S, K), dtype=jnp.float32)

    # Deterministic parameter init (matching torch Linear shapes & uniform init).
    bound_w = 1.0 / jnp.sqrt(float(E + K))
    w_weight = jax.random.uniform(kw, (E, E + K), jnp.float32, -bound_w, bound_w)
    w_bias = jax.random.uniform(kwb, (E,), jnp.float32, -bound_w, bound_w)
    bound_v = 1.0 / jnp.sqrt(float(E))
    v_weight = jax.random.uniform(kv, (1, E), jnp.float32, -bound_v, bound_v)
    v_bias = jax.random.uniform(kvb, (1,), jnp.float32, -bound_v, bound_v)

    key_padding_mask = jax.random.bernoulli(kkm, 0.25, (B, S))
    query_padding_mask = jax.random.bernoulli(kqm, 0.25, (B, Q))

    out = mask_aware_ssn_fuse(query, key, w_weight, w_bias, v_weight, v_bias,
                              key_padding_mask, query_padding_mask)
    out = jax.block_until_ready(out)

    ref = _reference(query, key, w_weight, w_bias, v_weight, v_bias,
                     key_padding_mask, query_padding_mask)

    kind = jax.devices()[0].device_kind.lower()
    bf16_used = any(t in kind for t in ("v6", "v7"))
    tol = 5e-2 if bf16_used else 1e-4   # bf16 tanh path loosens tolerance

    assert out.shape == (B, Q, S)
    assert bool(jnp.allclose(out, ref, rtol=tol, atol=tol)), "mismatch vs reference"

    print("KERNEL_OK")
</pallas_src>

<mosaic_0001>
module attributes {stable_mosaic.version = 11 : i64} {
  func.func @_fuse_kernel_small_e(%arg0: i32, %arg1: i32, %arg2: i32, %arg3: memref<1x8x32xf32, #tpu.memory_space<vmem>>, %arg4: memref<1x128x32xf32, #tpu.memory_space<vmem>>, %arg5: memref<32x32xf32, #tpu.memory_space<vmem>>, %arg6: memref<32x32xf32, #tpu.memory_space<vmem>>, %arg7: memref<1x32xf32, #tpu.memory_space<vmem>>, %arg8: memref<32xf32, #tpu.memory_space<smem>>, %arg9: memref<1xf32, #tpu.memory_space<smem>>, %arg10: memref<1x1x128xi32, #tpu.memory_space<vmem>>, %arg11: memref<1x8x1xi32, #tpu.memory_space<vmem>>, %arg12: memref<1x8x128xf32, #tpu.memory_space<vmem>>, %arg13: memref<8x32xf32, #tpu.memory_space<vmem>>, %arg14: memref<32x128xf32, #tpu.memory_space<vmem>>) attributes {dimension_semantics = [#tpu.dimension_semantics<parallel>, #tpu.dimension_semantics<parallel>, #tpu.dimension_semantics<parallel>], iteration_bounds = array<i64: 2, 1, 1>, scalar_prefetch = 0 : i64, scratch_operands = 2 : i64, tpu.core_type = #tpu.core_type<tc>, window_params = [{transform_indices = @transform_0, window_bounds = array<i64: 1, 8, 32>}, {transform_indices = @transform_1, window_bounds = array<i64: 1, 128, 32>}, {pipeline_mode = #tpu.pipeline_mode<synchronous>, transform_indices = @transform_2, window_bounds = array<i64: 32, 32>}, {pipeline_mode = #tpu.pipeline_mode<synchronous>, transform_indices = @transform_3, window_bounds = array<i64: 32, 32>}, {pipeline_mode = #tpu.pipeline_mode<synchronous>, transform_indices = @transform_4, window_bounds = array<i64: 1, 32>}, {transform_indices = @transform_5, window_bounds = array<i64: 32>}, {transform_indices = @transform_6, window_bounds = array<i64: 1>}, {transform_indices = @transform_7, window_bounds = array<i64: 1, 1, 128>}, {transform_indices = @transform_8, window_bounds = array<i64: 1, 8, 1>}, {transform_indices = @transform_9, window_bounds = array<i64: 1, 8, 128>}]} {
    %c0 = arith.constant 0 : index
    %c0_0 = arith.constant 0 : index
    %0 = vector.load %arg6[%c0, %c0_0] : memref<32x32xf32, #tpu.memory_space<vmem>>, vector<32x32xf32>
    %c0_1 = arith.constant 0 : index
    %c0_2 = arith.constant 0 : index
    %c0_3 = arith.constant 0 : index
    %1 = vector.load %arg4[%c0_1, %c0_2, %c0_3] : memref<1x128x32xf32, #tpu.memory_space<vmem>>, vector<1x128x32xf32>
    %2 = vector.shape_cast %1 : vector<1x128x32xf32> to vector<128x32xf32>
    %cst = arith.constant dense<0.000000e+00> : vector<32x128xf32>
    %3 = tpu.matmul %0, %2, %cst {dimension_numbers = #tpu.dot_dimension_numbers<[1], [1], [0], [0], [0, 0, 1, 0], [], []>} : vector<32x32xf32>, vector<128x32xf32>, vector<32x128xf32> -> vector<32x128xf32>
    %c0_4 = arith.constant 0 : index
    %c0_5 = arith.constant 0 : index
    %4 = vector.load %arg14[%c0_4, %c0_5] : memref<32x128xf32, #tpu.memory_space<vmem>>, vector<32x128xf32>
    tpu.vector_store %arg14[%c0_4, %c0_5], %3 {strides = array<i32>} : memref<32x128xf32, #tpu.memory_space<vmem>>, vector<32x128xf32>,
    %c0_6 = arith.constant 0 : index
    %c0_7 = arith.constant 0 : index
    %c0_8 = arith.constant 0 : index
    %5 = vector.load %arg3[%c0_6, %c0_7, %c0_8] : memref<1x8x32xf32, #tpu.memory_space<vmem>>, vector<1x8x32xf32>
    %6 = vector.shape_cast %5 : vector<1x8x32xf32> to vector<8x32xf32>
    %c0_9 = arith.constant 0 : index
    %c0_10 = arith.constant 0 : index
    %7 = vector.load %arg5[%c0_9, %c0_10] : memref<32x32xf32, #tpu.memory_space<vmem>>, vector<32x32xf32>
    %cst_11 = arith.constant dense<0.000000e+00> : vector<8x32xf32>
    %8 = tpu.matmul %6, %7, %cst_11 {dimension_numbers = #tpu.dot_dimension_numbers<[1], [0], [0], [1], [0, 0, 1, 1], [], []>} : vector<8x32xf32>, vector<32x32xf32>, vector<8x32xf32> -> vector<8x32xf32>
    %c0_12 = arith.constant 0 : index
    %c0_13 = arith.constant 0 : index
    %9 = vector.load %arg7[%c0_12, %c0_13] : memref<1x32xf32, #tpu.memory_space<vmem>>, vector<1x32xf32>
    %10 = vector.broadcast %9 : vector<1x32xf32> to vector<8x32xf32>
    %11 = arith.addf %8, %10 : vector<8x32xf32>
    %c0_14 = arith.constant 0 : index
    %c0_15 = arith.constant 0 : index
    %12 = vector.load %arg13[%c0_14, %c0_15] : memref<8x32xf32, #tpu.memory_space<vmem>>, vector<8x32xf32>
    tpu.vector_store %arg13[%c0_14, %c0_15], %11 {strides = array<i32>} : memref<8x32xf32, #tpu.memory_space<vmem>>, vector<8x32xf32>,
    %c0_16 = arith.constant 0 : index
    %c0_17 = arith.constant 0 : index
    %c0_18 = arith.constant 0 : index
    %13 = vector.load %arg10[%c0_16, %c0_17, %c0_18] : memref<1x1x128xi32, #tpu.memory_space<vmem>>, vector<1x1x128xi32>
    %14 = vector.shape_cast %13 : vector<1x1x128xi32> to vector<1x128xi32>
    %c0_i32 = arith.constant 0 : i32
    %15 = vector.broadcast %c0_i32 : i32 to vector<1x128xi32>
    %16 = arith.cmpi ne, %14, %15 : vector<1x128xi32>
    %c0_19 = arith.constant 0 : index
    %17 = memref.load %arg9[%c0_19] : memref<1xf32, #tpu.memory_space<smem>>
    %cst_20 = arith.constant 0.000000e+00 : f32
    %18 = vector.broadcast %cst_20 : f32 to vector<8x128xf32>
    %c0_21 = arith.constant 0 : index
    %c0_22 = arith.constant 0 : index
    %19 = vector.load %arg13[%c0_21, %c0_22] : memref<8x32xf32, #tpu.memory_space<vmem>>, vector<8x1xf32>
    %c0_23 = arith.constant 0 : index
    %c0_24 = arith.constant 0 : index
    %20 = vector.load %arg14[%c0_23, %c0_24] : memref<32x128xf32, #tpu.memory_space<vmem>>, vector<1x128xf32>
    %21 = vector.broadcast %19 : vector<8x1xf32> to vector<8x128xf32>
    %22 = vector.broadcast %20 : vector<1x128xf32> to vector<8x128xf32>
    %23 = arith.addf %21, %22 : vector<8x128xf32>
    %24 = math.tanh %23 : vector<8x128xf32>
    %c0_25 = arith.constant 0 : index
    %25 = memref.load %arg8[%c0_25] : memref<32xf32, #tpu.memory_space<smem>>
    %26 = vector.broadcast %25 : f32 to vector<8x128xf32>
    %27 = arith.mulf %26, %24 : vector<8x128xf32>
    %28 = arith.addf %18, %27 : vector<8x128xf32>
    %c0_26 = arith.constant 0 : index
    %c1 = arith.constant 1 : index
    %29 = vector.load %arg13[%c0_26, %c1] : memref<8x32xf32, #tpu.memory_space<vmem>>, vector<8x1xf32>
    %c1_27 = arith.constant 1 : index
    %c0_28 = arith.constant 0 : index
    %30 = vector.load %arg14[%c1_27, %c0_28] : memref<32x128xf32, #tpu.memory_space<vmem>>, vector<1x128xf32>
    %31 = vector.broadcast %29 : vector<8x1xf32> to vector<8x128xf32>
    %32 = vector.broadcast %30 : vector<1x128xf32> to vector<8x128xf32>
    %33 = arith.addf %31, %32 : vector<8x128xf32>
    %34 = math.tanh %33 : vector<8x128xf32>
    %c1_29 = arith.constant 1 : index
    %35 = memref.load %arg8[%c1_29] : memref<32xf32, #tpu.memory_space<smem>>
    %36 = vector.broadcast %35 : f32 to vector<8x128xf32>
    %37 = arith.mulf %36, %34 : vector<8x128xf32>
    %38 = arith.addf %28, %37 : vector<8x128xf32>
    %c0_30 = arith.constant 0 : index
    %c2 = arith.constant 2 : index
    %39 = vector.load %arg13[%c0_30, %c2] : memref<8x32xf32, #tpu.memory_space<vmem>>, vector<8x1xf32>
    %c2_31 = arith.constant 2 : index
    %c0_32 = arith.constant 0 : index
    %40 = vector.load %arg14[%c2_31, %c0_32] : memref<32x128xf32, #tpu.memory_space<vmem>>, vector<1x128xf32>
    %41 = vector.broadcast %39 : vector<8x1xf32> to vector<8x128xf32>
    %42 = vector.broadcast %40 : vector<1x128xf32> to vector<8x128xf32>
    %43 = arith.addf %41, %42 : vector<8x128xf32>
    %44 = math.tanh %43 : vector<8x128xf32>
    %c2_33 = arith.constant 2 : index
    %45 = memref.load %arg8[%c2_33] : memref<32xf32, #tpu.memory_space<smem>>
    %46 = vector.broadcast %45 : f32 to vector<8x128xf32>
    %47 = arith.mulf %46, %44 : vector<8x128xf32>
    %48 = arith.addf %38, %47 : vector<8x128xf32>
    %c0_34 = arith.constant 0 : index
    %c3 = arith.constant 3 : index
    %49 = vector.load %arg13[%c0_34, %c3] : memref<8x32xf32, #tpu.memory_space<vmem>>, vector<8x1xf32>
    %c3_35 = arith.constant 3 : index
    %c0_36 = arith.constant 0 : index
    %50 = vector.load %arg14[%c3_35, %c0_36] : memref<32x128xf32, #tpu.memory_space<vmem>>, vector<1x128xf32>
    %51 = vector.broadcast %49 : vector<8x1xf32> to vector<8x128xf32>
    %52 = vector.broadcast %50 : vector<1x128xf32> to vector<8x128xf32>
    %53 = arith.addf %51, %52 : vector<8x128xf32>
    %54 = math.tanh %53 : vector<8x128xf32>
    %c3_37 = arith.constant 3 : index
    %55 = memref.load %arg8[%c3_37] : memref<32xf32, #tpu.memory_space<smem>>
    %56 = vector.broadcast %55 : f32 to vector<8x128xf32>
    %57 = arith.mulf %56, %54 : vector<8x128xf32>
    %58 = arith.addf %48, %57 : vector<8x128xf32>
    %c0_38 = arith.constant 0 : index
    %c4 = arith.constant 4 : index
    %59 = vector.load %arg13[%c0_38, %c4] : memref<8x32xf32, #tpu.memory_space<vmem>>, vector<8x1xf32>
    %c4_39 = arith.constant 4 : index
    %c0_40 = arith.constant 0 : index
    %60 = vector.load %arg14[%c4_39, %c0_40] : memref<32x128xf32, #tpu.memory_space<vmem>>, vector<1x128xf32>
    %61 = vector.broadcast %59 : vector<8x1xf32> to vector<8x128xf32>
    %62 = vector.broadcast %60 : vector<1x128xf32> to vector<8x128xf32>
    %63 = arith.addf %61, %62 : vector<8x128xf32>
    %64 = math.tanh %63 : vector<8x128xf32>
    %c4_41 = arith.constant 4 : index
    %65 = memref.load %arg8[%c4_41] : memref<32xf32, #tpu.memory_space<smem>>
    %66 = vector.broadcast %65 : f32 to vector<8x128xf32>
    %67 = arith.mulf %66, %64 : vector<8x128xf32>
    %68 = arith.addf %58, %67 : vector<8x128xf32>
    %c0_42 = arith.constant 0 : index
    %c5 = arith.constant 5 : index
    %69 = vector.load %arg13[%c0_42, %c5] : memref<8x32xf32, #tpu.memory_space<vmem>>, vector<8x1xf32>
    %c5_43 = arith.constant 5 : index
    %c0_44 = arith.constant 0 : index
    %70 = vector.load %arg14[%c5_43, %c0_44] : memref<32x128xf32, #tpu.memory_space<vmem>>, vector<1x128xf32>
    %71 = vector.broadcast %69 : vector<8x1xf32> to vector<8x128xf32>
    %72 = vector.broadcast %70 : vector<1x128xf32> to vector<8x128xf32>
    %73 = arith.addf %71, %72 : vector<8x128xf32>
    %74 = math.tanh %73 : vector<8x128xf32>
    %c5_45 = arith.constant 5 : index
    %75 = memref.load %arg8[%c5_45] : memref<32xf32, #tpu.memory_space<smem>>
    %76 = vector.broadcast %75 : f32 to vector<8x128xf32>
    %77 = arith.mulf %76, %74 : vector<8x128xf32>
    %78 = arith.addf %68, %77 : vector<8x128xf32>
    %c0_46 = arith.constant 0 : index
    %c6 = arith.constant 6 : index
    %79 = vector.load %arg13[%c0_46, %c6] : memref<8x32xf32, #tpu.memory_space<vmem>>, vector<8x1xf32>
    %c6_47 = arith.constant 6 : index
    %c0_48 = arith.constant 0 : index
    %80 = vector.load %arg14[%c6_47, %c0_48] : memref<32x128xf32, #tpu.memory_space<vmem>>, vector<1x128xf32>
    %81 = vector.broadcast %79 : vector<8x1xf32> to vector<8x128xf32>
    %82 = vector.broadcast %80 : vector<1x128xf32> to vector<8x128xf32>
    %83 = arith.addf %81, %82 : vector<8x128xf32>
    %84 = math.tanh %83 : vector<8x128xf32>
    %c6_49 = arith.constant 6 : index
    %85 = memref.load %arg8[%c6_49] : memref<32xf32, #tpu.memory_space<smem>>
    %86 = vector.broadcast %85 : f32 to vector<8x128xf32>
    %87 = arith.mulf %86, %84 : vector<8x128xf32>
    %88 = arith.addf %78, %87 : vector<8x128xf32>
    %c0_50 = arith.constant 0 : index
    %c7 = arith.constant 7 : index
    %89 = vector.load %arg13[%c0_50, %c7] : memref<8x32xf32, #tpu.memory_space<vmem>>, vector<8x1xf32>
    %c7_51 = arith.constant 7 : index
    %c0_52 = arith.constant 0 : index
    %90 = vector.load %arg14[%c7_51, %c0_52] : memref<32x128xf32, #tpu.memory_space<vmem>>, vector<1x128xf32>
    %91 = vector.broadcast %89 : vector<8x1xf32> to vector<8x128xf32>
    %92 = vector.broadcast %90 : vector<1x128xf32> to vector<8x128xf32>
    %93 = arith.addf %91, %92 : vector<8x128xf32>
    %94 = math.tanh %93 : vector<8x128xf32>
    %c7_53 = arith.constant 7 : index
    %95 = memref.load %arg8[%c7_53] : memref<32xf32, #tpu.memory_space<smem>>
    %96 = vector.broadcast %95 : f32 to vector<8x128xf32>
    %97 = arith.mulf %96, %94 : vector<8x128xf32>
    %98 = arith.addf %88, %97 : vector<8x128xf32>
    %c0_54 = arith.constant 0 : index
    %c8 = arith.constant 8 : index
    %99 = vector.load %arg13[%c0_54, %c8] : memref<8x32xf32, #tpu.memory_space<vmem>>, vector<8x1xf32>
    %c8_55 = arith.constant 8 : index
    %c0_56 = arith.constant 0 : index
    %100 = vector.load %arg14[%c8_55, %c0_56] : memref<32x128xf32, #tpu.memory_space<vmem>>, vector<1x128xf32>
    %101 = vector.broadcast %99 : vector<8x1xf32> to vector<8x128xf32>
    %102 = vector.broadcast %100 : vector<1x128xf32> to vector<8x128xf32>
    %103 = arith.addf %101, %102 : vector<8x128xf32>
    %104 = math.tanh %103 : vector<8x128xf32>
    %c8_57 = arith.constant 8 : index
    %105 = memref.load %arg8[%c8_57] : memref<32xf32, #tpu.memory_space<smem>>
    %106 = vector.broadcast %105 : f32 to vector<8x128xf32>
    %107 = arith.mulf %106, %104 : vector<8x128xf32>
    %108 = arith.addf %98, %107 : vector<8x128xf32>
    %c0_58 = arith.constant 0 : index
    %c9 = arith.constant 9 : index
    %109 = vector.load %arg13[%c0_58, %c9] : memref<8x32xf32, #tpu.memory_space<vmem>>, vector<8x1xf32>
    %c9_59 = arith.constant 9 : index
    %c0_60 = arith.constant 0 : index
    %110 = vector.load %arg14[%c9_59, %c0_60] : memref<32x128xf32, #tpu.memory_space<vmem>>, vector<1x128xf32>
    %111 = vector.broadcast %109 : vector<8x1xf32> to vector<8x128xf32>
    %112 = vector.broadcast %110 : vector<1x128xf32> to vector<8x128xf32>
    %113 = arith.addf %111, %112 : vector<8x128xf32>
    %114 = math.tanh %113 : vector<8x128xf32>
    %c9_61 = arith.constant 9 : index
    %115 = memref.load %arg8[%c9_61] : memref<32xf32, #tpu.memory_space<smem>>
    %116 = vector.broadcast %115 : f32 to vector<8x128xf32>
    %117 = arith.mulf %116, %114 : vector<8x128xf32>
    %118 = arith.addf %108, %117 : vector<8x128xf32>
    %c0_62 = arith.constant 0 : index
    %c10 = arith.constant 10 : index
    %119 = vector.load %arg13[%c0_62, %c10] : memref<8x32xf32, #tpu.memory_space<vmem>>, vector<8x1xf32>
    %c10_63 = arith.constant 10 : index
    %c0_64 = arith.constant 0 : index
    %120 = vector.load %arg14[%c10_63, %c0_64] : memref<32x128xf32, #tpu.memory_space<vmem>>, vector<1x128xf32>
    %121 = vector.broadcast %119 : vector<8x1xf32> to vector<8x128xf32>
    %122 = vector.broadcast %120 : vector<1x128xf32> to vector<8x128xf32>
    %123 = arith.addf %121, %122 : vector<8x128xf32>
    %124 = math.tanh %123 : vector<8x128xf32>
    %c10_65 = arith.constant 10 : index
    %125 = memref.load %arg8[%c10_65] : memref<32xf32, #tpu.memory_space<smem>>
    %126 = vector.broadcast %125 : f32 to vector<8x128xf32>
    %127 = arith.mulf %126, %124 : vector<8x128xf32>
    %128 = arith.addf %118, %127 : vector<8x128xf32>
    %c0_66 = arith.constant 0 : index
    %c11 = arith.constant 11 : index
    %129 = vector.load %arg13[%c0_66, %c11] : memref<8x32xf32, #tpu.memory_space<vmem>>, vector<8x1xf32>
    %c11_67 = arith.constant 11 : index
    %c0_68 = arith.constant 0 : index
    %130 = vector.load %arg14[%c11_67, %c0_68] : memref<32x128xf32, #tpu.memory_space<vmem>>, vector<1x128xf32>
    %131 = vector.broadcast %129 : vector<8x1xf32> to vector<8x128xf32>
    %132 = vector.broadcast %130 : vector<1x128xf32> to vector<8x128xf32>
    %133 = arith.addf %131, %132 : vector<8x128xf32>
    %134 = math.tanh %133 : vector<8x128xf32>
    %c11_69 = arith.constant 11 : index
    %135 = memref.load %arg8[%c11_69] : memref<32xf32, #tpu.memory_space<smem>>
    %136 = vector.broadcast %135 : f32 to vector<8x128xf32>
    %137 = arith.mulf %136, %134 : vector<8x128xf32>
    %138 = arith.addf %128, %137 : vector<8x128xf32>
    %c0_70 = arith.constant 0 : index
    %c12 = arith.constant 12 : index
    %139 = vector.load %arg13[%c0_70, %c12] : memref<8x32xf32, #tpu.memory_space<vmem>>, vector<8x1xf32>
    %c12_71 = arith.constant 12 : index
    %c0_72 = arith.constant 0 : index
    %140 = vector.load %arg14[%c12_71, %c0_72] : memref<32x128xf32, #tpu.memory_space<vmem>>, vector<1x128xf32>
    %141 = vector.broadcast %139 : vector<8x1xf32> to vector<8x128xf32>
    %142 = vector.broadcast %140 : vector<1x128xf32> to vector<8x128xf32>
    %143 = arith.addf %141, %142 : vector<8x128xf32>
    %144 = math.tanh %143 : vector<8x128xf32>
    %c12_73 = arith.constant 12 : index
    %145 = memref.load %arg8[%c12_73] : memref<32xf32, #tpu.memory_space<smem>>
    %146 = vector.broadcast %145 : f32 to vector<8x128xf32>
    %147 = arith.mulf %146, %144 : vector<8x128xf32>
    %148 = arith.addf %138, %147 : vector<8x128xf32>
    %c0_74 = arith.constant 0 : index
    %c13 = arith.constant 13 : index
    %149 = vector.load %arg13[%c0_74, %c13] : memref<8x32xf32, #tpu.memory_space<vmem>>, vector<8x1xf32>
    %c13_75 = arith.constant 13 : index
    %c0_76 = arith.constant 0 : index
    %150 = vector.load %arg14[%c13_75, %c0_76] : memref<32x128xf32, #tpu.memory_space<vmem>>, vector<1x128xf32>
    %151 = vector.broadcast %149 : vector<8x1xf32> to vector<8x128xf32>
    %152 = vector.broadcast %150 : vector<1x128xf32> to vector<8x128xf32>
    %153 = arith.addf %151, %152 : vector<8x128xf32>
    %154 = math.tanh %153 : vector<8x128xf32>
    %c13_77 = arith.constant 13 : index
    %155 = memref.load %arg8[%c13_77] : memref<32xf32, #tpu.memory_space<smem>>
    %156 = vector.broadcast %155 : f32 to vector<8x128xf32>
    %157 = arith.mulf %156, %154 : vector<8x128xf32>
    %158 = arith.addf %148, %157 : vector<8x128xf32>
    %c0_78 = arith.constant 0 : index
    %c14 = arith.constant 14 : index
    %159 = vector.load %arg13[%c0_78, %c14] : memref<8x32xf32, #tpu.memory_space<vmem>>, vector<8x1xf32>
    %c14_79 = arith.constant 14 : index
    %c0_80 = arith.constant 0 : index
    %160 = vector.load %arg14[%c14_79, %c0_80] : memref<32x128xf32, #tpu.memory_space<vmem>>, vector<1x128xf32>
    %161 = vector.broadcast %159 : vector<8x1xf32> to vector<8x128xf32>
    %162 = vector.broadcast %160 : vector<1x128xf32> to vector<8x128xf32>
    %163 = arith.addf %161, %162 : vector<8x128xf32>
    %164 = math.tanh %163 : vector<8x128xf32>
    %c14_81 = arith.constant 14 : index
    %165 = memref.load %arg8[%c14_81] : memref<32xf32, #tpu.memory_space<smem>>
    %166 = vector.broadcast %165 : f32 to vector<8x128xf32>
    %167 = arith.mulf %166, %164 : vector<8x128xf32>
    %168 = arith.addf %158, %167 : vector<8x128xf32>
    %c0_82 = arith.constant 0 : index
    %c15 = arith.constant 15 : index
    %169 = vector.load %arg13[%c0_82, %c15] : memref<8x32xf32, #tpu.memory_space<vmem>>, vector<8x1xf32>
    %c15_83 = arith.constant 15 : index
    %c0_84 = arith.constant 0 : index
    %170 = vector.load %arg14[%c15_83, %c0_84] : memref<32x128xf32, #tpu.memory_space<vmem>>, vector<1x128xf32>
    %171 = vector.broadcast %169 : vector<8x1xf32> to vector<8x128xf32>
    %172 = vector.broadcast %170 : vector<1x128xf32> to vector<8x128xf32>
    %173 = arith.addf %171, %172 : vector<8x128xf32>
    %174 = math.tanh %173 : vector<8x128xf32>
    %c15_85 = arith.constant 15 : index
    %175 = memref.load %arg8[%c15_85] : memref<32xf32, #tpu.memory_space<smem>>
    %176 = vector.broadcast %175 : f32 to vector<8x128xf32>
    %177 = arith.mulf %176, %174 : vector<8x128xf32>
    %178 = arith.addf %168, %177 : vector<8x128xf32>
    %c0_86 = arith.constant 0 : index
    %c16 = arith.constant 16 : index
    %179 = vector.load %arg13[%c0_86, %c16] : memref<8x32xf32, #tpu.memory_space<vmem>>, vector<8x1xf32>
    %c16_87 = arith.constant 16 : index
    %c0_88 = arith.constant 0 : index
    %180 = vector.load %arg14[%c16_87, %c0_88] : memref<32x128xf32, #tpu.memory_space<vmem>>, vector<1x128xf32>
    %181 = vector.broadcast %179 : vector<8x1xf32> to vector<8x128xf32>
    %182 = vector.broadcast %180 : vector<1x128xf32> to vector<8x128xf32>
    %183 = arith.addf %181, %182 : vector<8x128xf32>
    %184 = math.tanh %183 : vector<8x128xf32>
    %c16_89 = arith.constant 16 : index
    %185 = memref.load %arg8[%c16_89] : memref<32xf32, #tpu.memory_space<smem>>
    %186 = vector.broadcast %185 : f32 to vector<8x128xf32>
    %187 = arith.mulf %186, %184 : vector<8x128xf32>
    %188 = arith.addf %178, %187 : vector<8x128xf32>
    %c0_90 = arith.constant 0 : index
    %c17 = arith.constant 17 : index
    %189 = vector.load %arg13[%c0_90, %c17] : memref<8x32xf32, #tpu.memory_space<vmem>>, vector<8x1xf32>
    %c17_91 = arith.constant 17 : index
    %c0_92 = arith.constant 0 : index
    %190 = vector.load %arg14[%c17_91, %c0_92] : memref<32x128xf32, #tpu.memory_space<vmem>>, vector<1x128xf32>
    %191 = vector.broadcast %189 : vector<8x1xf32> to vector<8x128xf32>
    %192 = vector.broadcast %190 : vector<1x128xf32> to vector<8x128xf32>
    %193 = arith.addf %191, %192 : vector<8x128xf32>
    %194 = math.tanh %193 : vector<8x128xf32>
    %c17_93 = arith.constant 17 : index
    %195 = memref.load %arg8[%c17_93] : memref<32xf32, #tpu.memory_space<smem>>
    %196 = vector.broadcast %195 : f32 to vector<8x128xf32>
    %197 = arith.mulf %196, %194 : vector<8x128xf32>
    %198 = arith.addf %188, %197 : vector<8x128xf32>
    %c0_94 = arith.constant 0 : index
    %c18 = arith.constant 18 : index
    %199 = vector.load %arg13[%c0_94, %c18] : memref<8x32xf32, #tpu.memory_space<vmem>>, vector<8x1xf32>
    %c18_95 = arith.constant 18 : index
    %c0_96 = arith.constant 0 : index
    %200 = vector.load %arg14[%c18_95, %c0_96] : memref<32x128xf32, #tpu.memory_space<vmem>>, vector<1x128xf32>
    %201 = vector.broadcast %199 : vector<8x1xf32> to vector<8x128xf32>
    %202 = vector.broadcast %200 : vector<1x128xf32> to vector<8x128xf32>
    %203 = arith.addf %201, %202 : vector<8x128xf32>
    %204 = math.tanh %203 : vector<8x128xf32>
    %c18_97 = arith.constant 18 : index
    %205 = memref.load %arg8[%c18_97] : memref<32xf32, #tpu.memory_space<smem>>
    %206 = vector.broadcast %205 : f32 to vector<8x128xf32>
    %207 = arith.mulf %206, %204 : vector<8x128xf32>
    %208 = arith.addf %198, %207 : vector<8x128xf32>
    %c0_98 = arith.constant 0 : index
    %c19 = arith.constant 19 : index
    %209 = vector.load %arg13[%c0_98, %c19] : memref<8x32xf32, #tpu.memory_space<vmem>>, vector<8x1xf32>
    %c19_99 = arith.constant 19 : index
    %c0_100 = arith.constant 0 : index
    %210 = vector.load %arg14[%c19_99, %c0_100] : memref<32x128xf32, #tpu.memory_space<vmem>>, vector<1x128xf32>
    %211 = vector.broadcast %209 : vector<8x1xf32> to vector<8x128xf32>
    %212 = vector.broadcast %210 : vector<1x128xf32> to vector<8x128xf32>
    %213 = arith.addf %211, %212 : vector<8x128xf32>
    %214 = math.tanh %213 : vector<8x128xf32>
    %c19_101 = arith.constant 19 : index
    %215 = memref.load %arg8[%c19_101] : memref<32xf32, #tpu.memory_space<smem>>
    %216 = vector.broadcast %215 : f32 to vector<8x128xf32>
    %217 = arith.mulf %216, %214 : vector<8x128xf32>
    %218 = arith.addf %208, %217 : vector<8x128xf32>
    %c0_102 = arith.constant 0 : index
    %c20 = arith.constant 20 : index
    %219 = vector.load %arg13[%c0_102, %c20] : memref<8x32xf32, #tpu.memory_space<vmem>>, vector<8x1xf32>
    %c20_103 = arith.constant 20 : index
    %c0_104 = arith.constant 0 : index
    %220 = vector.load %arg14[%c20_103, %c0_104] : memref<32x128xf32, #tpu.memory_space<vmem>>, vector<1x128xf32>
    %221 = vector.broadcast %219 : vector<8x1xf32> to vector<8x128xf32>
    %222 = vector.broadcast %220 : vector<1x128xf32> to vector<8x128xf32>
    %223 = arith.addf %221, %222 : vector<8x128xf32>
    %224 = math.tanh %223 : vector<8x128xf32>
    %c20_105 = arith.constant 20 : index
    %225 = memref.load %arg8[%c20_105] : memref<32xf32, #tpu.memory_space<smem>>
    %226 = vector.broadcast %225 : f32 to vector<8x128xf32>
    %227 = arith.mulf %226, %224 : vector<8x128xf32>
    %228 = arith.addf %218, %227 : vector<8x128xf32>
    %c0_106 = arith.constant 0 : index
    %c21 = arith.constant 21 : index
    %229 = vector.load %arg13[%c0_106, %c21] : memref<8x32xf32, #tpu.memory_space<vmem>>, vector<8x1xf32>
    %c21_107 = arith.constant 21 : index
    %c0_108 = arith.constant 0 : index
    %230 = vector.load %arg14[%c21_107, %c0_108] : memref<32x128xf32, #tpu.memory_space<vmem>>, vector<1x128xf32>
    %231 = vector.broadcast %229 : vector<8x1xf32> to vector<8x128xf32>
    %232 = vector.broadcast %230 : vector<1x128xf32> to vector<8x128xf32>
    %233 = arith.addf %231, %232 : vector<8x128xf32>
    %234 = math.tanh %233 : vector<8x128xf32>
    %c21_109 = arith.constant 21 : index
    %235 = memref.load %arg8[%c21_109] : memref<32xf32, #tpu.memory_space<smem>>
    %236 = vector.broadcast %235 : f32 to vector<8x128xf32>
    %237 = arith.mulf %236, %234 : vector<8x128xf32>
    %238 = arith.addf %228, %237 : vector<8x128xf32>
    %c0_110 = arith.constant 0 : index
    %c22 = arith.constant 22 : index
    %239 = vector.load %arg13[%c0_110, %c22] : memref<8x32xf32, #tpu.memory_space<vmem>>, vector<8x1xf32>
    %c22_111 = arith.constant 22 : index
    %c0_112 = arith.constant 0 : index
    %240 = vector.load %arg14[%c22_111, %c0_112] : memref<32x128xf32, #tpu.memory_space<vmem>>, vector<1x128xf32>
    %241 = vector.broadcast %239 : vector<8x1xf32> to vector<8x128xf32>
    %242 = vector.broadcast %240 : vector<1x128xf32> to vector<8x128xf32>
    %243 = arith.addf %241, %242 : vector<8x128xf32>
    %244 = math.tanh %243 : vector<8x128xf32>
    %c22_113 = arith.constant 22 : index
    %245 = memref.load %arg8[%c22_113] : memref<32xf32, #tpu.memory_space<smem>>
    %246 = vector.broadcast %245 : f32 to vector<8x128xf32>
    %247 = arith.mulf %246, %244 : vector<8x128xf32>
    %248 = arith.addf %238, %247 : vector<8x128xf32>
    %c0_114 = arith.constant 0 : index
    %c23 = arith.constant 23 : index
    %249 = vector.load %arg13[%c0_114, %c23] : memref<8x32xf32, #tpu.memory_space<vmem>>, vector<8x1xf32>
    %c23_115 = arith.constant 23 : index
    %c0_116 = arith.constant 0 : index
    %250 = vector.load %arg14[%c23_115, %c0_116] : memref<32x128xf32, #tpu.memory_space<vmem>>, vector<1x128xf32>
    %251 = vector.broadcast %249 : vector<8x1xf32> to vector<8x128xf32>
    %252 = vector.broadcast %250 : vector<1x128xf32> to vector<8x128xf32>
    %253 = arith.addf %251, %252 : vector<8x128xf32>
    %254 = math.tanh %253 : vector<8x128xf32>
    %c23_117 = arith.constant 23 : index
    %255 = memref.load %arg8[%c23_117] : memref<32xf32, #tpu.memory_space<smem>>
    %256 = vector.broadcast %255 : f32 to vector<8x128xf32>
    %257 = arith.mulf %256, %254 : vector<8x128xf32>
    %258 = arith.addf %248, %257 : vector<8x128xf32>
    %c0_118 = arith.constant 0 : index
    %c24 = arith.constant 24 : index
    %259 = vector.load %arg13[%c0_118, %c24] : memref<8x32xf32, #tpu.memory_space<vmem>>, vector<8x1xf32>
    %c24_119 = arith.constant 24 : index
    %c0_120 = arith.constant 0 : index
    %260 = vector.load %arg14[%c24_119, %c0_120] : memref<32x128xf32, #tpu.memory_space<vmem>>, vector<1x128xf32>
    %261 = vector.broadcast %259 : vector<8x1xf32> to vector<8x128xf32>
    %262 = vector.broadcast %260 : vector<1x128xf32> to vector<8x128xf32>
    %263 = arith.addf %261, %262 : vector<8x128xf32>
    %264 = math.tanh %263 : vector<8x128xf32>
    %c24_121 = arith.constant 24 : index
    %265 = memref.load %arg8[%c24_121] : memref<32xf32, #tpu.memory_space<smem>>
    %266 = vector.broadcast %265 : f32 to vector<8x128xf32>
    %267 = arith.mulf %266, %264 : vector<8x128xf32>
    %268 = arith.addf %258, %267 : vector<8x128xf32>
    %c0_122 = arith.constant 0 : index
    %c25 = arith.constant 25 : index
    %269 = vector.load %arg13[%c0_122, %c25] : memref<8x32xf32, #tpu.memory_space<vmem>>, vector<8x1xf32>
    %c25_123 = arith.constant 25 : index
    %c0_124 = arith.constant 0 : index
    %270 = vector.load %arg14[%c25_123, %c0_124] : memref<32x128xf32, #tpu.memory_space<vmem>>, vector<1x128xf32>
    %271 = vector.broadcast %269 : vector<8x1xf32> to vector<8x128xf32>
    %272 = vector.broadcast %270 : vector<1x128xf32> to vector<8x128xf32>
    %273 = arith.addf %271, %272 : vector<8x128xf32>
    %274 = math.tanh %273 : vector<8x128xf32>
    %c25_125 = arith.constant 25 : index
    %275 = memref.load %arg8[%c25_125] : memref<32xf32, #tpu.memory_space<smem>>
    %276 = vector.broadcast %275 : f32 to vector<8x128xf32>
    %277 = arith.mulf %276, %274 : vector<8x128xf32>
    %278 = arith.addf %268, %277 : vector<8x128xf32>
    %c0_126 = arith.constant 0 : index
    %c26 = arith.constant 26 : index
    %279 = vector.load %arg13[%c0_126, %c26] : memref<8x32xf32, #tpu.memory_space<vmem>>, vector<8x1xf32>
    %c26_127 = arith.constant 26 : index
    %c0_128 = arith.constant 0 : index
    %280 = vector.load %arg14[%c26_127, %c0_128] : memref<32x128xf32, #tpu.memory_space<vmem>>, vector<1x128xf32>
    %281 = vector.broadcast %279 : vector<8x1xf32> to vector<8x128xf32>
    %282 = vector.broadcast %280 : vector<1x128xf32> to vector<8x128xf32>
    %283 = arith.addf %281, %282 : vector<8x128xf32>
    %284 = math.tanh %283 : vector<8x128xf32>
    %c26_129 = arith.constant 26 : index
    %285 = memref.load %arg8[%c26_129] : memref<32xf32, #tpu.memory_space<smem>>
    %286 = vector.broadcast %285 : f32 to vector<8x128xf32>
    %287 = arith.mulf %286, %284 : vector<8x128xf32>
    %288 = arith.addf %278, %287 : vector<8x128xf32>
    %c0_130 = arith.constant 0 : index
    %c27 = arith.constant 27 : index
    %289 = vector.load %arg13[%c0_130, %c27] : memref<8x32xf32, #tpu.memory_space<vmem>>, vector<8x1xf32>
    %c27_131 = arith.constant 27 : index
    %c0_132 = arith.constant 0 : index
    %290 = vector.load %arg14[%c27_131, %c0_132] : memref<32x128xf32, #tpu.memory_space<vmem>>, vector<1x128xf32>
    %291 = vector.broadcast %289 : vector<8x1xf32> to vector<8x128xf32>
    %292 = vector.broadcast %290 : vector<1x128xf32> to vector<8x128xf32>
    %293 = arith.addf %291, %292 : vector<8x128xf32>
    %294 = math.tanh %293 : vector<8x128xf32>
    %c27_133 = arith.constant 27 : index
    %295 = memref.load %arg8[%c27_133] : memref<32xf32, #tpu.memory_space<smem>>
    %296 = vector.broadcast %295 : f32 to vector<8x128xf32>
    %297 = arith.mulf %296, %294 : vector<8x128xf32>
    %298 = arith.addf %288, %297 : vector<8x128xf32>
    %c0_134 = arith.constant 0 : index
    %c28 = arith.constant 28 : index
    %299 = vector.load %arg13[%c0_134, %c28] : memref<8x32xf32, #tpu.memory_space<vmem>>, vector<8x1xf32>
    %c28_135 = arith.constant 28 : index
    %c0_136 = arith.constant 0 : index
    %300 = vector.load %arg14[%c28_135, %c0_136] : memref<32x128xf32, #tpu.memory_space<vmem>>, vector<1x128xf32>
    %301 = vector.broadcast %299 : vector<8x1xf32> to vector<8x128xf32>
    %302 = vector.broadcast %300 : vector<1x128xf32> to vector<8x128xf32>
    %303 = arith.addf %301, %302 : vector<8x128xf32>
    %304 = math.tanh %303 : vector<8x128xf32>
    %c28_137 = arith.constant 28 : index
    %305 = memref.load %arg8[%c28_137] : memref<32xf32, #tpu.memory_space<smem>>
    %306 = vector.broadcast %305 : f32 to vector<8x128xf32>
    %307 = arith.mulf %306, %304 : vector<8x128xf32>
    %308 = arith.addf %298, %307 : vector<8x128xf32>
    %c0_138 = arith.constant 0 : index
    %c29 = arith.constant 29 : index
    %309 = vector.load %arg13[%c0_138, %c29] : memref<8x32xf32, #tpu.memory_space<vmem>>, vector<8x1xf32>
    %c29_139 = arith.constant 29 : index
    %c0_140 = arith.constant 0 : index
    %310 = vector.load %arg14[%c29_139, %c0_140] : memref<32x128xf32, #tpu.memory_space<vmem>>, vector<1x128xf32>
    %311 = vector.broadcast %309 : vector<8x1xf32> to vector<8x128xf32>
    %312 = vector.broadcast %310 : vector<1x128xf32> to vector<8x128xf32>
    %313 = arith.addf %311, %312 : vector<8x128xf32>
    %314 = math.tanh %313 : vector<8x128xf32>
    %c29_141 = arith.constant 29 : index
    %315 = memref.load %arg8[%c29_141] : memref<32xf32, #tpu.memory_space<smem>>
    %316 = vector.broadcast %315 : f32 to vector<8x128xf32>
    %317 = arith.mulf %316, %314 : vector<8x128xf32>
    %318 = arith.addf %308, %317 : vector<8x128xf32>
    %c0_142 = arith.constant 0 : index
    %c30 = arith.constant 30 : index
    %319 = vector.load %arg13[%c0_142, %c30] : memref<8x32xf32, #tpu.memory_space<vmem>>, vector<8x1xf32>
    %c30_143 = arith.constant 30 : index
    %c0_144 = arith.constant 0 : index
    %320 = vector.load %arg14[%c30_143, %c0_144] : memref<32x128xf32, #tpu.memory_space<vmem>>, vector<1x128xf32>
    %321 = vector.broadcast %319 : vector<8x1xf32> to vector<8x128xf32>
    %322 = vector.broadcast %320 : vector<1x128xf32> to vector<8x128xf32>
    %323 = arith.addf %321, %322 : vector<8x128xf32>
    %324 = math.tanh %323 : vector<8x128xf32>
    %c30_145 = arith.constant 30 : index
    %325 = memref.load %arg8[%c30_145] : memref<32xf32, #tpu.memory_space<smem>>
    %326 = vector.broadcast %325 : f32 to vector<8x128xf32>
    %327 = arith.mulf %326, %324 : vector<8x128xf32>
    %328 = arith.addf %318, %327 : vector<8x128xf32>
    %c0_146 = arith.constant 0 : index
    %c31 = arith.constant 31 : index
    %329 = vector.load %arg13[%c0_146, %c31] : memref<8x32xf32, #tpu.memory_space<vmem>>, vector<8x1xf32>
    %c31_147 = arith.constant 31 : index
    %c0_148 = arith.constant 0 : index
    %330 = vector.load %arg14[%c31_147, %c0_148] : memref<32x128xf32, #tpu.memory_space<vmem>>, vector<1x128xf32>
    %331 = vector.broadcast %329 : vector<8x1xf32> to vector<8x128xf32>
    %332 = vector.broadcast %330 : vector<1x128xf32> to vector<8x128xf32>
    %333 = arith.addf %331, %332 : vector<8x128xf32>
    %334 = math.tanh %333 : vector<8x128xf32>
    %c31_149 = arith.constant 31 : index
    %335 = memref.load %arg8[%c31_149] : memref<32xf32, #tpu.memory_space<smem>>
    %336 = vector.broadcast %335 : f32 to vector<8x128xf32>
    %337 = arith.mulf %336, %334 : vector<8x128xf32>
    %338 = arith.addf %328, %337 : vector<8x128xf32>
    %339 = vector.broadcast %17 : f32 to vector<8x128xf32>
    %340 = arith.addf %338, %339 : vector<8x128xf32>
    %cst_150 = arith.constant -9.99999956E+24 : f32
    %341 = vector.shape_cast %16 : vector<1x128xi1> to vector<1x128xi1>
    %342 = vector.broadcast %341 : vector<1x128xi1> to vector<8x128xi1>
    %343 = vector.broadcast %cst_150 : f32 to vector<8x128xf32>
    %344 = arith.select %342, %343, %340 : vector<8x128xi1>, vector<8x128xf32>
    %c0_151 = arith.constant 0 : index
    %c0_152 = arith.constant 0 : index
    %c0_153 = arith.constant 0 : index
    %345 = vector.load %arg11[%c0_151, %c0_152, %c0_153] : memref<1x8x1xi32, #tpu.memory_space<vmem>>, vector<1x8x1xi32>
    %346 = vector.shape_cast %345 : vector<1x8x1xi32> to vector<8x1xi32>
    %c0_i32_154 = arith.constant 0 : i32
    %347 = vector.broadcast %c0_i32_154 : i32 to vector<8x1xi32>
    %348 = arith.cmpi ne, %346, %347 : vector<8x1xi32>
    %cst_155 = arith.constant 0.000000e+00 : f32
    %349 = vector.shape_cast %348 : vector<8x1xi1> to vector<8x1xi1>
    %350 = vector.broadcast %349 : vector<8x1xi1> to vector<8x128xi1>
    %351 = vector.broadcast %cst_155 : f32 to vector<8x128xf32>
    %352 = arith.select %350, %351, %344 : vector<8x128xi1>, vector<8x128xf32>
    %c0_156 = arith.constant 0 : index
    %c0_157 = arith.constant 0 : index
    %c0_158 = arith.constant 0 : index
    %353 = vector.load %arg12[%c0_156, %c0_157, %c0_158] : memref<1x8x128xf32, #tpu.memory_space<vmem>>, vector<1x8x128xf32>
    %354 = vector.shape_cast %353 : vector<1x8x128xf32> to vector<8x128xf32>
    %355 = vector.shape_cast %352 : vector<8x128xf32> to vector<1x8x128xf32>
    tpu.vector_store %arg12[%c0_156, %c0_157, %c0_158], %355 {strides = array<i32>} : memref<1x8x128xf32, #tpu.memory_space<vmem>>, vector<1x8x128xf32>,
    return
  }
  func.func @transform_0(%arg0: i32, %arg1: i32, %arg2: i32) -> (i32, i32, i32) {
    %c0_i32 = arith.constant 0 : i32
    %c0_i32_0 = arith.constant 0 : i32
    return %arg0, %arg2, %c0_i32 : i32, i32, i32
  }
  func.func @transform_1(%arg0: i32, %arg1: i32, %arg2: i32) -> (i32, i32, i32) {
    %c0_i32 = arith.constant 0 : i32
    %c0_i32_0 = arith.constant 0 : i32
    return %arg0, %arg1, %c0_i32 : i32, i32, i32
  }
  func.func @transform_2(%arg0: i32, %arg1: i32, %arg2: i32) -> (i32, i32) {
    %c0_i32 = arith.constant 0 : i32
    %c0_i32_0 = arith.constant 0 : i32
    %c0_i32_1 = arith.constant 0 : i32
    return %c0_i32, %c0_i32_0 : i32, i32
  }
  func.func @transform_3(%arg0: i32, %arg1: i32, %arg2: i32) -> (i32, i32) {
    %c0_i32 = arith.constant 0 : i32
    %c0_i32_0 = arith.constant 0 : i32
    %c0_i32_1 = arith.constant 0 : i32
    return %c0_i32, %c0_i32_0 : i32, i32
  }
  func.func @transform_4(%arg0: i32, %arg1: i32, %arg2: i32) -> (i32, i32) {
    %c0_i32 = arith.constant 0 : i32
    %c0_i32_0 = arith.constant 0 : i32
    %c0_i32_1 = arith.constant 0 : i32
    return %c0_i32, %c0_i32_0 : i32, i32
  }
  func.func @transform_5(%arg0: i32, %arg1: i32, %arg2: i32) -> i32 {
    %c0_i32 = arith.constant 0 : i32
    %c0_i32_0 = arith.constant 0 : i32
    return %c0_i32 : i32
  }
  func.func @transform_6(%arg0: i32, %arg1: i32, %arg2: i32) -> i32 {
    %c0_i32 = arith.constant 0 : i32
    %c0_i32_0 = arith.constant 0 : i32
    return %c0_i32 : i32
  }
  func.func @transform_7(%arg0: i32, %arg1: i32, %arg2: i32) -> (i32, i32, i32) {
    %c0_i32 = arith.constant 0 : i32
    %c0_i32_0 = arith.constant 0 : i32
    return %arg0, %c0_i32, %arg1 : i32, i32, i32
  }
  func.func @transform_8(%arg0: i32, %arg1: i32, %arg2: i32) -> (i32, i32, i32) {
    %c0_i32 = arith.constant 0 : i32
    %c0_i32_0 = arith.constant 0 : i32
    return %arg0, %arg2, %c0_i32 : i32, i32, i32
  }
  func.func @transform_9(%arg0: i32, %arg1: i32, %arg2: i32) -> (i32, i32, i32) {
    %c0_i32 = arith.constant 0 : i32
    return %arg0, %arg2, %arg1 : i32, i32, i32
  }
}

</mosaic_0001>

<llo_original>
// kernel: _mask_aware_ssn_fuse_impl.1
$region0: #{_mask_aware_ssn_fuse_impl.1}
  #allocation0 [shape = 'u32[]', space=smem, size = 0x4, offset = 0x4, fixed_abs, tag = 'smem constant byte address 0x4 - core index']
  #allocation1 [shape = 'u32[144,128]{1,0:T(1,128)}', space=vmem, size = 0x12000, scoped, tag = 'internal scratch']
  #allocation2 [shape = 'f32[8,32]{1,0:T(8,128)}', space=vmem, size = 0x1000, scoped, tag = 'scratch operand']
  #allocation3 [shape = 'f32[32,128]{1,0:T(8,128)}', space=vmem, size = 0x4000, scoped, tag = 'scratch operand']
  #allocation4 [shape = 'f32[1]{0:T(128)S(6)}', space=smem, size = 0x200, scoped, tag = 'scoped memory for _mask_aware_ssn_fuse_impl.1']
  %s0 = inlined_call_operand.vmem [shape: f32[2,8,32], index: 0, kind: input, shape index: {}]
  %s1 = inlined_call_operand.vmem [shape: f32[2,128,32], index: 1, kind: input, shape index: {}]
  %s2 = inlined_call_operand.vmem [shape: f32[32,32], index: 2, kind: input, shape index: {}]
  %s3 = inlined_call_operand.vmem [shape: f32[32,32], index: 3, kind: input, shape index: {}]
  %s4 = inlined_call_operand.vmem [shape: f32[1,32], index: 4, kind: input, shape index: {}]
  %s5 = inlined_call_operand.vmem [shape: f32[32], index: 5, kind: input, shape index: {}]
  %s6 = inlined_call_operand.<no memory space> [shape: f32[1], index: 6, kind: input, shape index: {}]
  %s7 = inlined_call_operand.vmem [shape: s32[2,1,128], index: 7, kind: input, shape index: {}]
  %s8 = inlined_call_operand.vmem [shape: s32[2,8,1], index: 8, kind: input, shape index: {}]
  %s9 = inlined_call_operand.hbm [shape: f32[2,8,128], index: 9, kind: output, shape index: {}]
  %s10 = sld [smem:[#allocation0]]
  $region73: #{_mask_aware_ssn_fuse_impl.1} parent=0
    _
  %s12 = ssub.s32 1, %s10
  %s13 = scalar_select 0, %s12, %s10
  %14 = sst [smem:[#allocation4]] %s6
  $region1: #{_mask_aware_ssn_fuse_impl.1} parent=0
    #allocation5 [shape = 'u8[512]{0}', space=smem, size = 0x200, scoped, tag = 'input window, operand 5, single buffered']
    #allocation6 [shape = 's32[2]{0}', space=sflag, size = 0x8, scoped, tag = 'scoped memory for _mask_aware_ssn_fuse_impl.1']
    #allocation7 [shape = 's32[2]{0}', space=sflag, size = 0x8, scoped, tag = 'scoped memory for _mask_aware_ssn_fuse_impl.1']
    #allocation8 [shape = 'u8[8192]{0}', space=vmem, size = 0x2000, scoped, tag = 'output window, operand 0']
    %15 = vsyncpa [#allocation7], 0
    %16 = vsyncpa [#allocation6], 0
    %s17 = scalar_lea.sflag [#allocation6], 1
    %18 = vsyncpa %s17, 0
    loop: start=0, step=1, limit=4
    $region2: #{_mask_aware_ssn_fuse_impl.1} parent=1 // loop_pre_header
      _
    $region3: #{_mask_aware_ssn_fuse_impl.1} parent=1 // loop_header
      %s20 = sphi 0, %s24
      %p21 = scmp.ge.s32.totalorder %s20, 4
      %s27 = sphi 0, %s46
      %s28 = sphi 0, %s42
      %s29 = sphi 0, %s38
      %s30 = sphi 0, %s27
      %s31 = sphi 0, %s28
      %s32 = sphi 0, %s29
      %s33 = sphi 0, %s30
      %s34 = sphi 0, %s31
      %s35 = sphi 0, %s32
      %s51 = sphi 0, %s53
      %s54 = sphi 0, %s51
      %s55 = sphi 0, %s54
      %s71 = sphi 0, %s55
      %s79 = sphi 0, %s81
      %s82 = sphi 0, %s79
      %s83 = sphi 0, %s82
      %s99 = sphi 0, %s83
      %s103 = sphi 0, %s103
      %s105 = sphi 0, %s103
      %s106 = sphi 0, %s105
      %s120 = sphi 0, %s106
      %s124 = sphi 0, %s124
      %s126 = sphi 0, %s124
      %s127 = sphi 0, %s126
      %s141 = sphi 0, %s127
      %s145 = sphi 0, %s145
      %s147 = sphi 0, %s145
      %s148 = sphi 0, %s147
      %s162 = sphi 0, %s148
      %s166 = sphi 0, %s166
      %s168 = sphi 0, %s166
      %s169 = sphi 0, %s168
      %s183 = sphi 0, %s169
      %s187 = sphi 0, %s187
      %s189 = sphi 0, %s187
      %s190 = sphi 0, %s189
      %s204 = sphi 0, %s190
      %s212 = sphi 0, %s214
      %s215 = sphi 0, %s212
      %s216 = sphi 0, %s215
      %s232 = sphi 0, %s216
      %s240 = sphi 0, %s242
      %s243 = sphi 0, %s240
      %s244 = sphi 0, %s243
      %s260 = sphi 0, %s244
      %s270 = sphi 0, %s272
      %s273 = sphi 0, %s270
      %s274 = sphi 0, %s273
      %s290 = sphi 0, %s274
    $region4: #{_mask_aware_ssn_fuse_impl.1} parent=1 // loop_header_branch
      %23 = sbr.rel (%p21) target = $region8
    $region5: #{_mask_aware_ssn_fuse_impl.1} parent=1 // loop_body
      %s25 = ssub.s32 %s20, 1
      %s26 = ssub.s32 %s20, 2
      %s36 = sadd.s32 1, %s29
      %p37 = scmp.ge.s32.totalorder %s36, 1
      %s38 = scalar_select %p37, 0, %s36
      %s39 = sadd.s32 1, %s28
      %s40 = scalar_select %p37, %s39, %s28
      %p41 = scmp.ge.s32.totalorder %s40, 1
      %s42 = scalar_select %p41, 0, %s40
      %s43 = sadd.s32 1, %s27
      %s44 = scalar_select %p41, %s43, %s27
      %p45 = scmp.ge.s32.totalorder %s44, 2
      %s46 = scalar_select %p45, 0, %s44
      %s47 = ssub.s32 %s27, %s46
      %s48 = ssub.s32 %s29, %s38
      %s49 = sor.u32 %s47, %s48
      %p50 = scmp.eq.s32.totalorder %s49, 0
      %s52 = sadd.s32 %s51, 1
      %s53 = scalar_select %p50, %s51, %s52
      %p56 = pneg %p50
      %p57 = scmp.eq.s32.totalorder %s20, 1
      %p58 = por %p56, %p57
      %p59 = scmp.ne.s32.totalorder %s51, %s54
      %p60 = scmp.eq.s32.totalorder %s20, 0
      %p61 = por %p59, %p60
      %p62 = scmp.ne.s32.totalorder %s51, %s54
      %p63 = scmp.eq.s32.totalorder %s25, 1
      %p64 = por %p62, %p63
      %p65 = scmp.ne.s32.totalorder %s54, %s55
      %p66 = scmp.eq.s32.totalorder %s25, 0
      %p67 = por %p65, %p66
      %p68 = scmp.ne.s32.totalorder %s54, %s55
      %p69 = scmp.eq.s32.totalorder %s26, 1
      %p70 = por %p68, %p69
      %p72 = scmp.ne.s32.totalorder %s55, %s71
      %p73 = scmp.eq.s32.totalorder %s26, 0
      %p74 = por %p72, %p73
      %s75 = ssub.s32 %s27, %s46
      %s76 = ssub.s32 %s28, %s42
      %s77 = sor.u32 %s75, %s76
      %p78 = scmp.eq.s32.totalorder %s77, 0
      %s80 = sadd.s32 %s79, 1
      %s81 = scalar_select %p78, %s79, %s80
      %p84 = pneg %p78
      %p85 = scmp.eq.s32.totalorder %s20, 1
      %p86 = por %p84, %p85
      %p87 = scmp.ne.s32.totalorder %s79, %s82
      %p88 = scmp.eq.s32.totalorder %s20, 0
      %p89 = por %p87, %p88
      %p90 = scmp.ne.s32.totalorder %s79, %s82
      %p91 = scmp.eq.s32.totalorder %s25, 1
      %p92 = por %p90, %p91
      %p93 = scmp.ne.s32.totalorder %s82, %s83
      %p94 = scmp.eq.s32.totalorder %s25, 0
      %p95 = por %p93, %p94
      %p96 = scmp.ne.s32.totalorder %s82, %s83
      %p97 = scmp.eq.s32.totalorder %s26, 1
      %p98 = por %p96, %p97
      %p100 = scmp.ne.s32.totalorder %s83, %s99
      %p101 = scmp.eq.s32.totalorder %s26, 0
      %p102 = por %p100, %p101
      %s104 = sadd.s32 %s103, 1
      %p107 = scmp.eq.s32.totalorder %s20, 1
      %p108 = scmp.ne.s32.totalorder %s103, %s105
      %p109 = scmp.eq.s32.totalorder %s20, 0
      %p110 = por %p108, %p109
      %p111 = scmp.ne.s32.totalorder %s103, %s105
      %p112 = scmp.eq.s32.totalorder %s25, 1
      %p113 = por %p111, %p112
      %p114 = scmp.ne.s32.totalorder %s105, %s106
      %p115 = scmp.eq.s32.totalorder %s25, 0
      %p116 = por %p114, %p115
      %p117 = scmp.ne.s32.totalorder %s105, %s106
      %p118 = scmp.eq.s32.totalorder %s26, 1
      %p119 = por %p117, %p118
      %p121 = scmp.ne.s32.totalorder %s106, %s120
      %p122 = scmp.eq.s32.totalorder %s26, 0
      %p123 = por %p121, %p122
      %s125 = sadd.s32 %s124, 1
      %p128 = scmp.eq.s32.totalorder %s20, 1
      %p129 = scmp.ne.s32.totalorder %s124, %s126
      %p130 = scmp.eq.s32.totalorder %s20, 0
      %p131 = por %p129, %p130
      %p132 = scmp.ne.s32.totalorder %s124, %s126
      %p133 = scmp.eq.s32.totalorder %s25, 1
      %p134 = por %p132, %p133
      %p135 = scmp.ne.s32.totalorder %s126, %s127
      %p136 = scmp.eq.s32.totalorder %s25, 0
      %p137 = por %p135, %p136
      %p138 = scmp.ne.s32.totalorder %s126, %s127
      %p139 = scmp.eq.s32.totalorder %s26, 1
      %p140 = por %p138, %p139
      %p142 = scmp.ne.s32.totalorder %s127, %s141
      %p143 = scmp.eq.s32.totalorder %s26, 0
      %p144 = por %p142, %p143
      %s146 = sadd.s32 %s145, 1
      %p149 = scmp.eq.s32.totalorder %s20, 1
      %p150 = scmp.ne.s32.totalorder %s145, %s147
      %p151 = scmp.eq.s32.totalorder %s20, 0
      %p152 = por %p150, %p151
      %p153 = scmp.ne.s32.totalorder %s145, %s147
      %p154 = scmp.eq.s32.totalorder %s25, 1
      %p155 = por %p153, %p154
      %p156 = scmp.ne.s32.totalorder %s147, %s148
      %p157 = scmp.eq.s32.totalorder %s25, 0
      %p158 = por %p156, %p157
      %p159 = scmp.ne.s32.totalorder %s147, %s148
      %p160 = scmp.eq.s32.totalorder %s26, 1
      %p161 = por %p159, %p160
      %p163 = scmp.ne.s32.totalorder %s148, %s162
      %p164 = scmp.eq.s32.totalorder %s26, 0
      %p165 = por %p163, %p164
      %s167 = sadd.s32 %s166, 1
      %p170 = scmp.eq.s32.totalorder %s20, 1
      %p171 = scmp.ne.s32.totalorder %s166, %s168
      %p172 = scmp.eq.s32.totalorder %s20, 0
      %p173 = por %p171, %p172
      %p174 = scmp.ne.s32.totalorder %s166, %s168
      %p175 = scmp.eq.s32.totalorder %s25, 1
      %p176 = por %p174, %p175
      %p177 = scmp.ne.s32.totalorder %s168, %s169
      %p178 = scmp.eq.s32.totalorder %s25, 0
      %p179 = por %p177, %p178
      %p180 = scmp.ne.s32.totalorder %s168, %s169
      %p181 = scmp.eq.s32.totalorder %s26, 1
      %p182 = por %p180, %p181
      %p184 = scmp.ne.s32.totalorder %s169, %s183
      %p185 = scmp.eq.s32.totalorder %s26, 0
      %p186 = por %p184, %p185
      %s188 = sadd.s32 %s187, 1
      %p191 = scmp.eq.s32.totalorder %s20, 1
      %p192 = scmp.ne.s32.totalorder %s187, %s189
      %p193 = scmp.eq.s32.totalorder %s20, 0
      %p194 = por %p192, %p193
      %p195 = scmp.ne.s32.totalorder %s187, %s189
      %p196 = scmp.eq.s32.totalorder %s25, 1
      %p197 = por %p195, %p196
      %p198 = scmp.ne.s32.totalorder %s189, %s190
      %p199 = scmp.eq.s32.totalorder %s25, 0
      %p200 = por %p198, %p199
      %p201 = scmp.ne.s32.totalorder %s189, %s190
      %p202 = scmp.eq.s32.totalorder %s26, 1
      %p203 = por %p201, %p202
      %p205 = scmp.ne.s32.totalorder %s190, %s204
      %p206 = scmp.eq.s32.totalorder %s26, 0
      %p207 = por %p205, %p206
      %s208 = ssub.s32 %s27, %s46
      %s209 = ssub.s32 %s28, %s42
      %s210 = sor.u32 %s208, %s209
      %p211 = scmp.eq.s32.totalorder %s210, 0
      %s213 = sadd.s32 %s212, 1
      %s214 = scalar_select %p211, %s212, %s213
      %p217 = pneg %p211
      %p218 = scmp.eq.s32.totalorder %s20, 1
      %p219 = por %p217, %p218
      %p220 = scmp.ne.s32.totalorder %s212, %s215
      %p221 = scmp.eq.s32.totalorder %s20, 0
      %p222 = por %p220, %p221
      %p223 = scmp.ne.s32.totalorder %s212, %s215
      %p224 = scmp.eq.s32.totalorder %s25, 1
      %p225 = por %p223, %p224
      %p226 = scmp.ne.s32.totalorder %s215, %s216
      %p227 = scmp.eq.s32.totalorder %s25, 0
      %p228 = por %p226, %p227
      %p229 = scmp.ne.s32.totalorder %s215, %s216
      %p230 = scmp.eq.s32.totalorder %s26, 1
      %p231 = por %p229, %p230
      %p233 = scmp.ne.s32.totalorder %s216, %s232
      %p234 = scmp.eq.s32.totalorder %s26, 0
      %p235 = por %p233, %p234
      %s236 = ssub.s32 %s27, %s46
      %s237 = ssub.s32 %s29, %s38
      %s238 = sor.u32 %s236, %s237
      %p239 = scmp.eq.s32.totalorder %s238, 0
      %s241 = sadd.s32 %s240, 1
      %s242 = scalar_select %p239, %s240, %s241
      %p245 = pneg %p239
      %p246 = scmp.eq.s32.totalorder %s20, 1
      %p247 = por %p245, %p246
      %p248 = scmp.ne.s32.totalorder %s240, %s243
      %p249 = scmp.eq.s32.totalorder %s20, 0
      %p250 = por %p248, %p249
      %p251 = scmp.ne.s32.totalorder %s240, %s243
      %p252 = scmp.eq.s32.totalorder %s25, 1
      %p253 = por %p251, %p252
      %p254 = scmp.ne.s32.totalorder %s243, %s244
      %p255 = scmp.eq.s32.totalorder %s25, 0
      %p256 = por %p254, %p255
      %p257 = scmp.ne.s32.totalorder %s243, %s244
      %p258 = scmp.eq.s32.totalorder %s26, 1
      %p259 = por %p257, %p258
      %p261 = scmp.ne.s32.totalorder %s244, %s260
      %p262 = scmp.eq.s32.totalorder %s26, 0
      %p263 = por %p261, %p262
      %s264 = ssub.s32 %s27, %s46
      %s265 = ssub.s32 %s29, %s38
      %s266 = sor.u32 %s264, %s265
      %s267 = ssub.s32 %s28, %s42
      %s268 = sor.u32 %s266, %s267
      %p269 = scmp.eq.s32.totalorder %s268, 0
      %s271 = sadd.s32 %s270, 1
      %s272 = scalar_select %p269, %s270, %s271
      %p275 = pneg %p269
      %p276 = scmp.eq.s32.totalorder %s20, 1
      %p277 = por %p275, %p276
      %p278 = scmp.ne.s32.totalorder %s270, %s273
      %p279 = scmp.eq.s32.totalorder %s20, 0
      %p280 = por %p278, %p279
      %p281 = scmp.ne.s32.totalorder %s270, %s273
      %p282 = scmp.eq.s32.totalorder %s25, 1
      %p283 = por %p281, %p282
      %p284 = scmp.ne.s32.totalorder %s273, %s274
      %p285 = scmp.eq.s32.totalorder %s25, 0
      %p286 = por %p284, %p285
      %p287 = scmp.ne.s32.totalorder %s273, %s274
      %p288 = scmp.eq.s32.totalorder %s26, 1
      %p289 = por %p287, %p288
      %p291 = scmp.ne.s32.totalorder %s274, %s290
      %p292 = scmp.eq.s32.totalorder %s26, 0
      %p293 = por %p291, %p292
      %p294 = scmp.le.s32.totalorder 1, %s20
      %p295 = scmp.lt.s32.totalorder %s20, 3
      %p296 = pnand %p294, %p295
      %p297 = pneg %p296
      // Predicated region
      $region9: #{_mask_aware_ssn_fuse_impl.1} parent=5 // pred_check
        _
      $region10: #{_mask_aware_ssn_fuse_impl.1} parent=5 // pred_check_branch
        %299 = sbr.rel (%p296) target = $region12
      $region11: #{_mask_aware_ssn_fuse_impl.1} parent=5 // pred_region
        %s300 = ssub.s32 %s20, 1
        // Predicated region
        $region13: #{_mask_aware_ssn_fuse_impl.1} parent=11 // pred_check
          %p301 = pneg %p116
        $region14: #{_mask_aware_ssn_fuse_impl.1} parent=11 // pred_check_branch
          %303 = sbr.rel (%p301) target = $region16
        $region15: #{_mask_aware_ssn_fuse_impl.1} parent=11 // pred_region
          _
        $region16: #{_mask_aware_ssn_fuse_impl.1} parent=11 // pred_fallthru
          _
        // Predicated region
        $region17: #{_mask_aware_ssn_fuse_impl.1} parent=11 // pred_check
          %p304 = pneg %p137
        $region18: #{_mask_aware_ssn_fuse_impl.1} parent=11 // pred_check_branch
          %306 = sbr.rel (%p304) target = $region20
        $region19: #{_mask_aware_ssn_fuse_impl.1} parent=11 // pred_region
          _
        $region20: #{_mask_aware_ssn_fuse_impl.1} parent=11 // pred_fallthru
          _
        // Predicated region
        $region21: #{_mask_aware_ssn_fuse_impl.1} parent=11 // pred_check
          %p307 = pneg %p158
        $region22: #{_mask_aware_ssn_fuse_impl.1} parent=11 // pred_check_branch
          %309 = sbr.rel (%p307) target = $region24
        $region23: #{_mask_aware_ssn_fuse_impl.1} parent=11 // pred_region
          _
        $region24: #{_mask_aware_ssn_fuse_impl.1} parent=11 // pred_fallthru
          _
        // Predicated region
        $region25: #{_mask_aware_ssn_fuse_impl.1} parent=11 // pred_check
          %p310 = pneg %p179
        $region26: #{_mask_aware_ssn_fuse_impl.1} parent=11 // pred_check_branch
          %312 = sbr.rel (%p310) target = $region28
        $region27: #{_mask_aware_ssn_fuse_impl.1} parent=11 // pred_region
          %s314 = ssub.s32 16, 16
          %315 = vsyncadd [#allocation7], %s314
          %s317 = sshll.u32 %s5, 4
          %s318 = int_to_ptr.vmem [resolvable:$true] %s317
          %320 = dma.vmem_to_smem %s318, 16, [#allocation5], [#allocation7]
        $region28: #{_mask_aware_ssn_fuse_impl.1} parent=11 // pred_fallthru
          _
        // Predicated region
        $region29: #{_mask_aware_ssn_fuse_impl.1} parent=11 // pred_check
          %p321 = pneg %p200
        $region30: #{_mask_aware_ssn_fuse_impl.1} parent=11 // pred_check_branch
          %323 = sbr.rel (%p321) target = $region32
        $region31: #{_mask_aware_ssn_fuse_impl.1} parent=11 // pred_region
          _
        $region32: #{_mask_aware_ssn_fuse_impl.1} parent=11 // pred_fallthru
          _
      $region12: #{_mask_aware_ssn_fuse_impl.1} parent=5 // pred_fallthru
        _
      %p324 = scmp.lt.s32.totalorder %s20, 2
      // Predicated region
      $region33: #{_mask_aware_ssn_fuse_impl.1} parent=5 // pred_check
        %p325 = pneg %p324
      $region34: #{_mask_aware_ssn_fuse_impl.1} parent=5 // pred_check_branch
        %327 = sbr.rel (%p325) target = $region36
      $region35: #{_mask_aware_ssn_fuse_impl.1} parent=5 // pred_region
        // Predicated region
        $region37: #{_mask_aware_ssn_fuse_impl.1} parent=35 // pred_check
          %p328 = pneg %p61
        $region38: #{_mask_aware_ssn_fuse_impl.1} parent=35 // pred_check_branch
          %330 = sbr.rel (%p328) target = $region40
        $region39: #{_mask_aware_ssn_fuse_impl.1} parent=35 // pred_region
          %p331 = scmp.lt.s32.totalorder %s27, 1
          %s332 = scalar_select %p331, %s27, 1
          %p333 = scmp.lt.s32.totalorder %s29, 0
          %s334 = scalar_select %p333, %s29, 0
          %s335 = sadd.s32 %s334, %s332
          %s336 = smul.addr %s335, 8
          %s337 = scalar_lea.vmem %s0, %s336
        $region40: #{_mask_aware_ssn_fuse_impl.1} parent=35 // pred_fallthru
          _
        // Predicated region
        $region41: #{_mask_aware_ssn_fuse_impl.1} parent=35 // pred_check
          %p338 = pneg %p89
        $region42: #{_mask_aware_ssn_fuse_impl.1} parent=35 // pred_check_branch
          %340 = sbr.rel (%p338) target = $region44
        $region43: #{_mask_aware_ssn_fuse_impl.1} parent=35 // pred_region
          %s341 = smul.u32 16, %s28
          %p342 = scmp.lt.s32.totalorder %s27, 1
          %s343 = scalar_select %p342, %s27, 1
          %p344 = scmp.lt.s32.totalorder %s341, 15
          %s345 = scalar_select %p344, %s341, 15
          %s346 = smul.addr %s343, 16
          %s347 = sadd.s32 %s345, %s346
          %s348 = smul.addr %s347, 8
          %s349 = scalar_lea.vmem %s1, %s348
          %s350 = smul.u32 16, %s28
        $region44: #{_mask_aware_ssn_fuse_impl.1} parent=35 // pred_fallthru
          _
        // Predicated region
        $region45: #{_mask_aware_ssn_fuse_impl.1} parent=35 // pred_check
          %p351 = pneg %p222
        $region46: #{_mask_aware_ssn_fuse_impl.1} parent=35 // pred_check_branch
          %353 = sbr.rel (%p351) target = $region48
        $region47: #{_mask_aware_ssn_fuse_impl.1} parent=35 // pred_region
          %p354 = scmp.lt.s32.totalorder %s27, 1
          %s355 = scalar_select %p354, %s27, 1
          %p356 = scmp.lt.s32.totalorder %s28, 0
          %s357 = scalar_select %p356, %s28, 0
          %s358 = sadd.s32 %s357, %s355
          %s359 = scalar_lea.vmem %s7, %s358
        $region48: #{_mask_aware_ssn_fuse_impl.1} parent=35 // pred_fallthru
          _
        // Predicated region
        $region49: #{_mask_aware_ssn_fuse_impl.1} parent=35 // pred_check
          %p360 = pneg %p250
        $region50: #{_mask_aware_ssn_fuse_impl.1} parent=35 // pred_check_branch
          %362 = sbr.rel (%p360) target = $region52
        $region51: #{_mask_aware_ssn_fuse_impl.1} parent=35 // pred_region
          %p363 = scmp.lt.s32.totalorder %s27, 1
          %s364 = scalar_select %p363, %s27, 1
          %p365 = scmp.lt.s32.totalorder %s29, 0
          %s366 = scalar_select %p365, %s29, 0
          %s367 = sadd.s32 %s366, %s364
          %s368 = smul.addr %s367, 8
          %s369 = scalar_lea.vmem %s8, %s368
        $region52: #{_mask_aware_ssn_fuse_impl.1} parent=35 // pred_fallthru
          _
      $region36: #{_mask_aware_ssn_fuse_impl.1} parent=5 // pred_fallthru
        _
      %p370 = scmp.le.s32.totalorder 1, %s20
      %p371 = scmp.lt.s32.totalorder %s20, 3
      %p372 = pnand %p370, %p371
      %p373 = pneg %p372
      // Predicated region
      $region53: #{_mask_aware_ssn_fuse_impl.1} parent=5 // pred_check
        _
      $region54: #{_mask_aware_ssn_fuse_impl.1} parent=5 // pred_check_branch
        %375 = sbr.rel (%p372) target = $region56
      $region55: #{_mask_aware_ssn_fuse_impl.1} parent=5 // pred_region
        %s376 = ssub.s32 %s20, 1
        // Predicated region
        $region57: #{_mask_aware_ssn_fuse_impl.1} parent=55 // pred_check
          %p377 = pneg %p179
        $region58: #{_mask_aware_ssn_fuse_impl.1} parent=55 // pred_check_branch
          %379 = sbr.rel (%p377) target = $region60
        $region59: #{_mask_aware_ssn_fuse_impl.1} parent=55 // pred_region
          %380 = dma.done [#allocation7], 16
        $region60: #{_mask_aware_ssn_fuse_impl.1} parent=55 // pred_fallthru
          _
        %381 = sfence
        %p382 = scmp.lt.s32.totalorder %s30, 1
        %s383 = scalar_select %p382, %s30, 1
        %p384 = scmp.lt.s32.totalorder %s32, 0
        %s385 = scalar_select %p384, %s32, 0
        %s386 = sadd.s32 %s385, %s383
        %s387 = smul.addr %s386, 8
        %s388 = scalar_lea.vmem %s0, %s387
        %p389 = pneg %p67
        %p390 = pneg %p64
        %s391 = smul.u32 16, %s31
        %p392 = scmp.lt.s32.totalorder %s30, 1
        %s393 = scalar_select %p392, %s30, 1
        %p394 = scmp.lt.s32.totalorder %s391, 15
        %s395 = scalar_select %p394, %s391, 15
        %s396 = smul.addr %s393, 16
        %s397 = sadd.s32 %s395, %s396
        %s398 = smul.addr %s397, 8
        %s399 = scalar_lea.vmem %s1, %s398
        %p400 = pneg %p95
        %p401 = pneg %p92
        %p402 = pneg %p116
        %p403 = pneg %p113
        %p404 = pneg %p137
        %p405 = pneg %p134
        %p406 = pneg %p158
        %p407 = pneg %p155
        %p408 = pneg %p179
        %p409 = pneg %p176
        %p410 = pneg %p200
        %p411 = pneg %p197
        %p412 = scmp.lt.s32.totalorder %s30, 1
        %s413 = scalar_select %p412, %s30, 1
        %p414 = scmp.lt.s32.totalorder %s31, 0
        %s415 = scalar_select %p414, %s31, 0
        %s416 = sadd.s32 %s415, %s413
        %s417 = scalar_lea.vmem %s7, %s416
        %p418 = pneg %p228
        %p419 = pneg %p225
        %p420 = scmp.lt.s32.totalorder %s30, 1
        %s421 = scalar_select %p420, %s30, 1
        %p422 = scmp.lt.s32.totalorder %s32, 0
        %s423 = scalar_select %p422, %s32, 0
        %s424 = sadd.s32 %s423, %s421
        %s425 = smul.addr %s424, 8
        %s426 = scalar_lea.vmem %s8, %s425
        %p427 = pneg %p256
        %p428 = pneg %p253
        %p429 = pneg %p286
        %p430 = pneg %p283
        %s431 = sand.u32 %s273, 1
        %s432 = scalar_lea.sflag [#allocation6], %s431
        %s433 = sand.u32 %s273, 1
        %s434 = smul.addr %s433, 8
        %s435 = scalar_lea.vmem [#allocation8], %s434
        %p436 = scmp.lt.s32.totalorder %s30, 1
        %s437 = scalar_select %p436, %s30, 1
        %p438 = scmp.lt.s32.totalorder %s32, 0
        %s439 = scalar_select %p438, %s32, 0
        %s440 = sadd.s32 %s439, %s437
        %s441 = smul.addr %s440, 8
        %s442 = scalar_lea.vmem %s0, %s441
        %s443 = smul.u32 16, %s31
        %p444 = scmp.lt.s32.totalorder %s30, 1
        %s445 = scalar_select %p444, %s30, 1
        %p446 = scmp.lt.s32.totalorder %s443, 15
        %s447 = scalar_select %p446, %s443, 15
        %s448 = smul.addr %s445, 16
        %s449 = sadd.s32 %s447, %s448
        %s450 = smul.addr %s449, 8
        %s451 = scalar_lea.vmem %s1, %s450
        %s452 = smul.u32 16, %s31
        %p453 = scmp.lt.s32.totalorder %s30, 1
        %s454 = scalar_select %p453, %s30, 1
        %p455 = scmp.lt.s32.totalorder %s31, 0
        %s456 = scalar_select %p455, %s31, 0
        %s457 = sadd.s32 %s456, %s454
        %s458 = scalar_lea.vmem %s7, %s457
        %p459 = scmp.lt.s32.totalorder %s30, 1
        %s460 = scalar_select %p459, %s30, 1
        %p461 = scmp.lt.s32.totalorder %s32, 0
        %s462 = scalar_select %p461, %s32, 0
        %s463 = sadd.s32 %s462, %s460
        %s464 = smul.addr %s463, 8
        %s465 = scalar_lea.vmem %s8, %s464
        %v466 = vld [vmem:[%s3] sm:$0xff]
        %v467 = vld [vmem:[%s3 + $0x8] sm:$0xff]
        %v468 = vld [vmem:[%s3 + $0x10] sm:$0xff]
        %v469 = vld [vmem:[%s3 + $0x18] sm:$0xff]
        %v470 = vld [vmem:[%s451] sm:$0xff]
        %v471 = vld [vmem:[%s451 + $0x8] sm:$0xff]
        %v472 = vld [vmem:[%s451 + $0x10] sm:$0xff]
        %v473 = vld [vmem:[%s451 + $0x18] sm:$0xff]
        %v474 = vld [vmem:[%s451 + $0x20] sm:$0xff]
        %v475 = vld [vmem:[%s451 + $0x28] sm:$0xff]
        %v476 = vld [vmem:[%s451 + $0x30] sm:$0xff]
        %v477 = vld [vmem:[%s451 + $0x38] sm:$0xff]
        %v478 = vld [vmem:[%s451 + $0x40] sm:$0xff]
        %v479 = vld [vmem:[%s451 + $0x48] sm:$0xff]
        %v480 = vld [vmem:[%s451 + $0x50] sm:$0xff]
        %v481 = vld [vmem:[%s451 + $0x58] sm:$0xff]
        %v482 = vld [vmem:[%s451 + $0x60] sm:$0xff]
        %v483 = vld [vmem:[%s451 + $0x68] sm:$0xff]
        %v484 = vld [vmem:[%s451 + $0x70] sm:$0xff]
        %v485 = vld [vmem:[%s451 + $0x78] sm:$0xff]
        %vm486 = vcmask 261120
        %v488 = vsel %vm486, %v466, 0
        %v491 = vsel %vm486, %v467, 0
        %v494 = vsel %vm486, %v468, 0
        %v497 = vsel %vm486, %v469, 0
        %v500 = vsel %vm486, %v470, 0
        %v503 = vsel %vm486, %v471, 0
        %v506 = vsel %vm486, %v472, 0
        %v509 = vsel %vm486, %v473, 0
        %v512 = vsel %vm486, %v474, 0
        %v515 = vsel %vm486, %v475, 0
        %v518 = vsel %vm486, %v476, 0
        %v521 = vsel %vm486, %v477, 0
        %v524 = vsel %vm486, %v478, 0
        %v527 = vsel %vm486, %v479, 0
        %v530 = vsel %vm486, %v480, 0
        %v533 = vsel %vm486, %v481, 0
        %v536 = vsel %vm486, %v482, 0
        %v539 = vsel %vm486, %v483, 0
        %v542 = vsel %vm486, %v484, 0
        %v545 = vsel %vm486, %v485, 0
        %547 = vmatprep.subr.mxu0 0.0
        %548 = vmatpush1.xpose.msra.mxu0 %v500
        %549 = vmatprep.subr.mxu0 0.0
        %550 = vmatpush1.xpose.msra.mxu0 %v503
        %551 = vmatprep.subr.mxu0 0.0
        %552 = vmatpush1.xpose.msra.mxu0 %v506
        %553 = vmatprep.subr.mxu0 0.0
        %554 = vmatpush1.xpose.msra.mxu0 %v509
        %555 = vmatprep.subr.mxu0 0.0
        %556 = vmatpush1.xpose.msra.mxu0 %v512
        %557 = vmatprep.subr.mxu0 0.0
        %558 = vmatpush1.xpose.msra.mxu0 %v515
        %559 = vmatprep.subr.mxu0 0.0
        %560 = vmatpush1.xpose.msra.mxu0 %v518
        %561 = vmatprep.subr.mxu0 0.0
        %562 = vmatpush1.xpose.msra.mxu0 %v521
        %563 = vmatprep.subr.mxu0 0.0
        %564 = vmatpush1.xpose.msra.mxu0 %v524
        %565 = vmatprep.subr.mxu0 0.0
        %566 = vmatpush1.xpose.msra.mxu0 %v527
        %567 = vmatprep.subr.mxu0 0.0
        %568 = vmatpush1.xpose.msra.mxu0 %v530
        %569 = vmatprep.subr.mxu0 0.0
        %570 = vmatpush1.xpose.msra.mxu0 %v533
        %571 = vmatprep.subr.mxu0 0.0
        %572 = vmatpush1.xpose.msra.mxu0 %v536
        %573 = vmatprep.subr.mxu0 0.0
        %574 = vmatpush1.xpose.msra.mxu0 %v539
        %575 = vmatprep.subr.mxu0 0.0
        %576 = vmatpush1.xpose.msra.mxu0 %v542
        %577 = vmatprep.subr.mxu0 0.0
        %578 = vmatpush1.xpose.msra.mxu0 %v545
        %579 = vmatprep.subr.mxu0 0.0
        %580 = vmatpush1.xpose.msra.mxu0 0.0
        %581 = vmatprep.subr.mxu0 0.0
        %582 = vmatpush1.xpose.msra.mxu0 0.0
        %583 = vmatprep.subr.mxu0 0.0
        %584 = vmatpush1.xpose.msra.mxu0 0.0
        %585 = vmatprep.subr.mxu0 0.0
        %586 = vmatpush1.xpose.msra.mxu0 0.0
        %587 = vmatprep.subr.mxu0 0.0
        %588 = vmatpush1.xpose.msra.mxu0 0.0
        %589 = vmatprep.subr.mxu0 0.0
        %590 = vmatpush1.xpose.msra.mxu0 0.0
        %591 = vmatprep.subr.mxu0 0.0
        %592 = vmatpush1.xpose.msra.mxu0 0.0
        %593 = vmatprep.subr.mxu0 0.0
        %594 = vmatpush1.xpose.msra.mxu0 0.0
        %595 = vmatprep.subr.mxu0 0.0
        %596 = vmatpush1.xpose.msra.mxu0 0.0
        %597 = vmatprep.subr.mxu0 0.0
        %598 = vmatpush1.xpose.msra.mxu0 0.0
        %599 = vmatprep.subr.mxu0 0.0
        %600 = vmatpush1.xpose.msra.mxu0 0.0
        %601 = vmatprep.subr.mxu0 0.0
        %602 = vmatpush1.xpose.msra.mxu0 0.0
        %603 = vmatprep.subr.mxu0 0.0
        %604 = vmatpush1.xpose.msra.mxu0 0.0
        %605 = vmatprep.subr.mxu0 0.0
        %606 = vmatpush1.xpose.msra.mxu0 0.0
        %607 = vmatprep.subr.mxu0 0.0
        %608 = vmatpush1.xpose.msra.mxu0 0.0
        %609 = vmatprep.subr.mxu0 0.0
        %610 = vmatpush1.xpose.msra.mxu0 0.0
        %611 = vmatprep.mubr.f32.mxu0 0.0
        %612 = vmatmul.mubr.f32.gmra.mrb[0].mxu0 %v488
        %v613 = vpop.f32.mrb[0].mxu0
        %v614 = vadd.f32 0.0, %v613
        %v615 = vpop.f32.mrb[0].mxu0
        %616 = vmatprep.mubr.f32.mxu0 0.0
        %617 = vmatmul.mubr.f32.gmra.mrb[0].mxu0 %v491
        %v618 = vpop.f32.mrb[0].mxu0
        %v619 = vadd.f32 0.0, %v618
        %v620 = vpop.f32.mrb[0].mxu0
        %621 = vmatprep.mubr.f32.mxu0 0.0
        %622 = vmatmul.mubr.f32.gmra.mrb[0].mxu0 %v494
        %v623 = vpop.f32.mrb[0].mxu0
        %v624 = vadd.f32 0.0, %v623
        %v625 = vpop.f32.mrb[0].mxu0
        %626 = vmatprep.mubr.f32.mxu0 0.0
        %627 = vmatmul.mubr.f32.gmra.mrb[0].mxu0 %v497
        %v628 = vpop.f32.mrb[0].mxu0
        %v629 = vadd.f32 0.0, %v628
        %v630 = vpop.f32.mrb[0].mxu0
        %631 = vdwg.mxu0
        %632 = vst [vmem:[#allocation3] sm:$0xff] %v614
        %633 = vst [vmem:[#allocation3 + $0x8] sm:$0xff] %v619
        %634 = vst [vmem:[#allocation3 + $0x10] sm:$0xff] %v624
        %635 = vst [vmem:[#allocation3 + $0x18] sm:$0xff] %v629
        %v636 = vld [vmem:[%s442] sm:$0xff]
        %v637 = vld [vmem:[%s2] sm:$0xff]
        %v638 = vld [vmem:[%s2 + $0x8] sm:$0xff]
        %v639 = vld [vmem:[%s2 + $0x10] sm:$0xff]
        %v640 = vld [vmem:[%s2 + $0x18] sm:$0xff]
        %v641 = vld [vmem:[%s4] sm:$0x1]
        %v643 = vlaneseq
        %v644 = vshrl.u32 %v643, 7
        %v645 = vsub.s32 0, %v644
        %v646 = vrot.slane %v641, %v645
        %v649 = vsel %vm486, %v636, 0
        %651 = vmatprep.subr.mxu0 0.0
        %652 = vmatpush1.msra.mxu0 %v637
        %653 = vmatprep.subr.mxu0 0.0
        %654 = vmatpush1.msra.mxu0 %v638
        %655 = vmatprep.subr.mxu0 0.0
        %656 = vmatpush1.msra.mxu0 %v639
        %657 = vmatprep.subr.mxu0 0.0
        %658 = vmatpush1.msra.mxu0 %v640
        %659 = vmatprep.subr.mxu0 0.0
        %660 = vmatpush1.msra.mxu0 0.0
        %661 = vmatprep.subr.mxu0 0.0
        %662 = vmatpush1.msra.mxu0 0.0
        %663 = vmatprep.subr.mxu0 0.0
        %664 = vmatpush1.msra.mxu0 0.0
        %665 = vmatprep.subr.mxu0 0.0
        %666 = vmatpush1.msra.mxu0 0.0
        %667 = vmatprep.subr.mxu0 0.0
        %668 = vmatpush1.msra.mxu0 0.0
        %669 = vmatprep.subr.mxu0 0.0
        %670 = vmatpush1.msra.mxu0 0.0
        %671 = vmatprep.subr.mxu0 0.0
        %672 = vmatpush1.msra.mxu0 0.0
        %673 = vmatprep.subr.mxu0 0.0
        %674 = vmatpush1.msra.mxu0 0.0
        %675 = vmatprep.subr.mxu0 0.0
        %676 = vmatpush1.msra.mxu0 0.0
        %677 = vmatprep.subr.mxu0 0.0
        %678 = vmatpush1.msra.mxu0 0.0
        %679 = vmatprep.subr.mxu0 0.0
        %680 = vmatpush1.msra.mxu0 0.0
        %681 = vmatprep.subr.mxu0 0.0
        %682 = vmatpush1.msra.mxu0 0.0
        %683 = vmatprep.subr.mxu0 0.0
        %684 = vmatpush1.msra.mxu0 0.0
        %685 = vmatprep.subr.mxu0 0.0
        %686 = vmatpush1.msra.mxu0 0.0
        %687 = vmatprep.subr.mxu0 0.0
        %688 = vmatpush1.msra.mxu0 0.0
        %689 = vmatprep.subr.mxu0 0.0
        %690 = vmatpush1.msra.mxu0 0.0
        %691 = vmatprep.subr.mxu0 0.0
        %692 = vmatpush1.msra.mxu0 0.0
        %693 = vmatprep.subr.mxu0 0.0
        %694 = vmatpush1.msra.mxu0 0.0
        %695 = vmatprep.subr.mxu0 0.0
        %696 = vmatpush1.msra.mxu0 0.0
        %697 = vmatprep.subr.mxu0 0.0
        %698 = vmatpush1.msra.mxu0 0.0
        %699 = vmatprep.subr.mxu0 0.0
        %700 = vmatpush1.msra.mxu0 0.0
        %701 = vmatprep.subr.mxu0 0.0
        %702 = vmatpush1.msra.mxu0 0.0
        %703 = vmatprep.subr.mxu0 0.0
        %704 = vmatpush1.msra.mxu0 0.0
        %705 = vmatprep.subr.mxu0 0.0
        %706 = vmatpush1.msra.mxu0 0.0
        %707 = vmatprep.subr.mxu0 0.0
        %708 = vmatpush1.msra.mxu0 0.0
        %709 = vmatprep.subr.mxu0 0.0
        %710 = vmatpush1.msra.mxu0 0.0
        %711 = vmatprep.subr.mxu0 0.0
        %712 = vmatpush1.msra.mxu0 0.0
        %713 = vmatprep.subr.mxu0 0.0
        %714 = vmatpush1.msra.mxu0 0.0
        %715 = vmatprep.mubr.f32.mxu0 0.0
        %716 = vmatmul.mubr.f32.gmra.mrb[0].mxu0 %v649
        %v717 = vpop.f32.mrb[0].mxu0
        %v718 = vadd.f32 %v646, %v717
        %v719 = vpop.f32.mrb[0].mxu0
        %720 = vdwg.mxu0
        %721 = vst.msk [vmem:[#allocation2] sm:$0xff] %vm486, %v718
        %v722 = vld [vmem:[%s458] sm:$0x1]
        %vm723 = vcmp.ne.s32.totalorder %v722, 0
        %s724 = sld [smem:[#allocation4]]
        %v725 = vld [vmem:[#allocation2] sm:$0xff]
        %v726 = vld [vmem:[#allocation3] sm:$0x1]
        %728 = vset.pattern.permute.xlu0 0
        %729 = vperm.xlu0 %728, %v725
        %v730 = vpop.permute.xlu0 %729
        %v732 = vlaneseq
        %v733 = vshrl.u32 %v732, 7
        %v734 = vsub.s32 0, %v733
        %v735 = vrot.slane %v726, %v734
        %v736 = vadd.f32 %v730, %v735
        %v737 = vtanh.pop %v736
        %s738 = sld [smem:[#allocation5]]
        %v739 = vstv %s738
        %v740 = vmul.f32 %v739, %v737
        %v741 = vadd.f32 %v740, 0.0
        %v742 = vld [vmem:[#allocation3 + $0x1] sm:$0x1]
        %743 = vset.pattern.permute.xlu0 1
        %744 = vperm.xlu0 %743, %v725
        %v745 = vpop.permute.xlu0 %744
        %v747 = vlaneseq
        %v748 = vshrl.u32 %v747, 7
        %v749 = vsub.s32 0, %v748
        %v750 = vrot.slane %v742, %v749
        %v751 = vadd.f32 %v745, %v750
        %v752 = vtanh.pop %v751
        %s753 = sld [smem:[#allocation5 + $0x1]]
        %v754 = vstv %s753
        %v755 = vmul.f32 %v754, %v752
        %v756 = vadd.f32 %v741, %v755
        %v757 = vld [vmem:[#allocation3 + $0x2] sm:$0x1]
        %758 = vset.pattern.permute.xlu0 2
        %759 = vperm.xlu0 %758, %v725
        %v760 = vpop.permute.xlu0 %759
        %v762 = vlaneseq
        %v763 = vshrl.u32 %v762, 7
        %v764 = vsub.s32 0, %v763
        %v765 = vrot.slane %v757, %v764
        %v766 = vadd.f32 %v760, %v765
        %v767 = vtanh.pop %v766
        %s768 = sld [smem:[#allocation5 + $0x2]]
        %v769 = vstv %s768
        %v770 = vmul.f32 %v769, %v767
        %v771 = vadd.f32 %v756, %v770
        %v772 = vld [vmem:[#allocation3 + $0x3] sm:$0x1]
        %773 = vset.pattern.permute.xlu0 3
        %774 = vperm.xlu0 %773, %v725
        %v775 = vpop.permute.xlu0 %774
        %v777 = vlaneseq
        %v778 = vshrl.u32 %v777, 7
        %v779 = vsub.s32 0, %v778
        %v780 = vrot.slane %v772, %v779
        %v781 = vadd.f32 %v775, %v780
        %v782 = vtanh.pop %v781
        %s783 = sld [smem:[#allocation5 + $0x3]]
        %v784 = vstv %s783
        %v785 = vmul.f32 %v784, %v782
        %v786 = vadd.f32 %v771, %v785
        %v787 = vld [vmem:[#allocation3 + $0x4] sm:$0x1]
        %788 = vset.pattern.permute.xlu0 4
        %789 = vperm.xlu0 %788, %v725
        %v790 = vpop.permute.xlu0 %789
        %v792 = vlaneseq
        %v793 = vshrl.u32 %v792, 7
        %v794 = vsub.s32 0, %v793
        %v795 = vrot.slane %v787, %v794
        %v796 = vadd.f32 %v790, %v795
        %v797 = vtanh.pop %v796
        %s798 = sld [smem:[#allocation5 + $0x4]]
        %v799 = vstv %s798
        %v800 = vmul.f32 %v799, %v797
        %v801 = vadd.f32 %v786, %v800
        %v802 = vld [vmem:[#allocation3 + $0x5] sm:$0x1]
        %803 = vset.pattern.permute.xlu0 5
        %804 = vperm.xlu0 %803, %v725
        %v805 = vpop.permute.xlu0 %804
        %v807 = vlaneseq
        %v808 = vshrl.u32 %v807, 7
        %v809 = vsub.s32 0, %v808
        %v810 = vrot.slane %v802, %v809
        %v811 = vadd.f32 %v805, %v810
        %v812 = vtanh.pop %v811
        %s813 = sld [smem:[#allocation5 + $0x5]]
        %v814 = vstv %s813
        %v815 = vmul.f32 %v814, %v812
        %v816 = vadd.f32 %v801, %v815
        %v817 = vld [vmem:[#allocation3 + $0x6] sm:$0x1]
        %818 = vset.pattern.permute.xlu0 6
        %819 = vperm.xlu0 %818, %v725
        %v820 = vpop.permute.xlu0 %819
        %v822 = vlaneseq
        %v823 = vshrl.u32 %v822, 7
        %v824 = vsub.s32 0, %v823
        %v825 = vrot.slane %v817, %v824
        %v826 = vadd.f32 %v820, %v825
        %v827 = vtanh.pop %v826
        %s828 = sld [smem:[#allocation5 + $0x6]]
        %v829 = vstv %s828
        %v830 = vmul.f32 %v829, %v827
        %v831 = vadd.f32 %v816, %v830
        %v832 = vld [vmem:[#allocation3 + $0x7] sm:$0x1]
        %833 = vset.pattern.permute.xlu0 7
        %834 = vperm.xlu0 %833, %v725
        %v835 = vpop.permute.xlu0 %834
        %v837 = vlaneseq
        %v838 = vshrl.u32 %v837, 7
        %v839 = vsub.s32 0, %v838
        %v840 = vrot.slane %v832, %v839
        %v841 = vadd.f32 %v835, %v840
        %v842 = vtanh.pop %v841
        %s843 = sld [smem:[#allocation5 + $0x7]]
        %v844 = vstv %s843
        %v845 = vmul.f32 %v844, %v842
        %v846 = vadd.f32 %v831, %v845
        %v847 = vld [vmem:[#allocation3 + $0x8] sm:$0x1]
        %848 = vset.pattern.permute.xlu0 8
        %849 = vperm.xlu0 %848, %v725
        %v850 = vpop.permute.xlu0 %849
        %v852 = vlaneseq
        %v853 = vshrl.u32 %v852, 7
        %v854 = vsub.s32 0, %v853
        %v855 = vrot.slane %v847, %v854
        %v856 = vadd.f32 %v850, %v855
        %v857 = vtanh.pop %v856
        %s858 = sld [smem:[#allocation5 + $0x8]]
        %v859 = vstv %s858
        %v860 = vmul.f32 %v859, %v857
        %v861 = vadd.f32 %v846, %v860
        %v862 = vld [vmem:[#allocation3 + $0x9] sm:$0x1]
        %863 = vset.pattern.permute.xlu0 9
        %864 = vperm.xlu0 %863, %v725
        %v865 = vpop.permute.xlu0 %864
        %v867 = vlaneseq
        %v868 = vshrl.u32 %v867, 7
        %v869 = vsub.s32 0, %v868
        %v870 = vrot.slane %v862, %v869
        %v871 = vadd.f32 %v865, %v870
        %v872 = vtanh.pop %v871
        %s873 = sld [smem:[#allocation5 + $0x9]]
        %v874 = vstv %s873
        %v875 = vmul.f32 %v874, %v872
        %v876 = vadd.f32 %v861, %v875
        %v877 = vld [vmem:[#allocation3 + $0xa] sm:$0x1]
        %878 = vset.pattern.permute.xlu0 10
        %879 = vperm.xlu0 %878, %v725
        %v880 = vpop.permute.xlu0 %879
        %v882 = vlaneseq
        %v883 = vshrl.u32 %v882, 7
        %v884 = vsub.s32 0, %v883
        %v885 = vrot.slane %v877, %v884
        %v886 = vadd.f32 %v880, %v885
        %v887 = vtanh.pop %v886
        %s888 = sld [smem:[#allocation5 + $0xa]]
        %v889 = vstv %s888
        %v890 = vmul.f32 %v889, %v887
        %v891 = vadd.f32 %v876, %v890
        %v892 = vld [vmem:[#allocation3 + $0xb] sm:$0x1]
        %893 = vset.pattern.permute.xlu0 11
        %894 = vperm.xlu0 %893, %v725
        %v895 = vpop.permute.xlu0 %894
        %v897 = vlaneseq
        %v898 = vshrl.u32 %v897, 7
        %v899 = vsub.s32 0, %v898
        %v900 = vrot.slane %v892, %v899
        %v901 = vadd.f32 %v895, %v900
        %v902 = vtanh.pop %v901
        %s903 = sld [smem:[#allocation5 + $0xb]]
        %v904 = vstv %s903
        %v905 = vmul.f32 %v904, %v902
        %v906 = vadd.f32 %v891, %v905
        %v907 = vld [vmem:[#allocation3 + $0xc] sm:$0x1]
        %908 = vset.pattern.permute.xlu0 12
        %909 = vperm.xlu0 %908, %v725
        %v910 = vpop.permute.xlu0 %909
        %v912 = vlaneseq
        %v913 = vshrl.u32 %v912, 7
        %v914 = vsub.s32 0, %v913
        %v915 = vrot.slane %v907, %v914
        %v916 = vadd.f32 %v910, %v915
        %v917 = vtanh.pop %v916
        %s918 = sld [smem:[#allocation5 + $0xc]]
        %v919 = vstv %s918
        %v920 = vmul.f32 %v919, %v917
        %v921 = vadd.f32 %v906, %v920
        %v922 = vld [vmem:[#allocation3 + $0xd] sm:$0x1]
        %923 = vset.pattern.permute.xlu0 13
        %924 = vperm.xlu0 %923, %v725
        %v925 = vpop.permute.xlu0 %924
        %v927 = vlaneseq
        %v928 = vshrl.u32 %v927, 7
        %v929 = vsub.s32 0, %v928
        %v930 = vrot.slane %v922, %v929
        %v931 = vadd.f32 %v925, %v930
        %v932 = vtanh.pop %v931
        %s933 = sld [smem:[#allocation5 + $0xd]]
        %v934 = vstv %s933
        %v935 = vmul.f32 %v934, %v932
        %v936 = vadd.f32 %v921, %v935
        %v937 = vld [vmem:[#allocation3 + $0xe] sm:$0x1]
        %938 = vset.pattern.permute.xlu0 14
        %939 = vperm.xlu0 %938, %v725
        %v940 = vpop.permute.xlu0 %939
        %v942 = vlaneseq
        %v943 = vshrl.u32 %v942, 7
        %v944 = vsub.s32 0, %v943
        %v945 = vrot.slane %v937, %v944
        %v946 = vadd.f32 %v940, %v945
        %v947 = vtanh.pop %v946
        %s948 = sld [smem:[#allocation5 + $0xe]]
        %v949 = vstv %s948
        %v950 = vmul.f32 %v949, %v947
        %v951 = vadd.f32 %v936, %v950
        %v952 = vld [vmem:[#allocation3 + $0xf] sm:$0x1]
        %953 = vset.pattern.permute.xlu0 15
        %954 = vperm.xlu0 %953, %v725
        %v955 = vpop.permute.xlu0 %954
        %v957 = vlaneseq
        %v958 = vshrl.u32 %v957, 7
        %v959 = vsub.s32 0, %v958
        %v960 = vrot.slane %v952, %v959
        %v961 = vadd.f32 %v955, %v960
        %v962 = vtanh.pop %v961
        %s963 = sld [smem:[#allocation5 + $0xf]]
        %v964 = vstv %s963
        %v965 = vmul.f32 %v964, %v962
        %v966 = vadd.f32 %v951, %v965
        %v967 = vld [vmem:[#allocation3 + $0x10] sm:$0x1]
        %968 = vset.pattern.permute.xlu0 16
        %969 = vperm.xlu0 %968, %v725
        %v970 = vpop.permute.xlu0 %969
        %v972 = vlaneseq
        %v973 = vshrl.u32 %v972, 7
        %v974 = vsub.s32 0, %v973
        %v975 = vrot.slane %v967, %v974
        %v976 = vadd.f32 %v970, %v975
        %v977 = vtanh.pop %v976
        %s978 = sld [smem:[#allocation5 + $0x10]]
        %v979 = vstv %s978
        %v980 = vmul.f32 %v979, %v977
        %v981 = vadd.f32 %v966, %v980
        %v982 = vld [vmem:[#allocation3 + $0x11] sm:$0x1]
        %983 = vset.pattern.permute.xlu0 17
        %984 = vperm.xlu0 %983, %v725
        %v985 = vpop.permute.xlu0 %984
        %v987 = vlaneseq
        %v988 = vshrl.u32 %v987, 7
        %v989 = vsub.s32 0, %v988
        %v990 = vrot.slane %v982, %v989
        %v991 = vadd.f32 %v985, %v990
        %v992 = vtanh.pop %v991
        %s993 = sld [smem:[#allocation5 + $0x11]]
        %v994 = vstv %s993
        %v995 = vmul.f32 %v994, %v992
        %v996 = vadd.f32 %v981, %v995
        %v997 = vld [vmem:[#allocation3 + $0x12] sm:$0x1]
        %998 = vset.pattern.permute.xlu0 18
        %999 = vperm.xlu0 %998, %v725
        %v1000 = vpop.permute.xlu0 %999
        %v1002 = vlaneseq
        %v1003 = vshrl.u32 %v1002, 7
        %v1004 = vsub.s32 0, %v1003
        %v1005 = vrot.slane %v997, %v1004
        %v1006 = vadd.f32 %v1000, %v1005
        %v1007 = vtanh.pop %v1006
        %s1008 = sld [smem:[#allocation5 + $0x12]]
        %v1009 = vstv %s1008
        %v1010 = vmul.f32 %v1009, %v1007
        %v1011 = vadd.f32 %v996, %v1010
        %v1012 = vld [vmem:[#allocation3 + $0x13] sm:$0x1]
        %1013 = vset.pattern.permute.xlu0 19
        %1014 = vperm.xlu0 %1013, %v725
        %v1015 = vpop.permute.xlu0 %1014
        %v1017 = vlaneseq
        %v1018 = vshrl.u32 %v1017, 7
        %v1019 = vsub.s32 0, %v1018
        %v1020 = vrot.slane %v1012, %v1019
        %v1021 = vadd.f32 %v1015, %v1020
        %v1022 = vtanh.pop %v1021
        %s1023 = sld [smem:[#allocation5 + $0x13]]
        %v1024 = vstv %s1023
        %v1025 = vmul.f32 %v1024, %v1022
        %v1026 = vadd.f32 %v1011, %v1025
        %v1027 = vld [vmem:[#allocation3 + $0x14] sm:$0x1]
        %1028 = vset.pattern.permute.xlu0 20
        %1029 = vperm.xlu0 %1028, %v725
        %v1030 = vpop.permute.xlu0 %1029
        %v1032 = vlaneseq
        %v1033 = vshrl.u32 %v1032, 7
        %v1034 = vsub.s32 0, %v1033
        %v1035 = vrot.slane %v1027, %v1034
        %v1036 = vadd.f32 %v1030, %v1035
        %v1037 = vtanh.pop %v1036
        %s1038 = sld [smem:[#allocation5 + $0x14]]
        %v1039 = vstv %s1038
        %v1040 = vmul.f32 %v1039, %v1037
        %v1041 = vadd.f32 %v1026, %v1040
        %v1042 = vld [vmem:[#allocation3 + $0x15] sm:$0x1]
        %1043 = vset.pattern.permute.xlu0 21
        %1044 = vperm.xlu0 %1043, %v725
        %v1045 = vpop.permute.xlu0 %1044
        %v1047 = vlaneseq
        %v1048 = vshrl.u32 %v1047, 7
        %v1049 = vsub.s32 0, %v1048
        %v1050 = vrot.slane %v1042, %v1049
        %v1051 = vadd.f32 %v1045, %v1050
        %v1052 = vtanh.pop %v1051
        %s1053 = sld [smem:[#allocation5 + $0x15]]
        %v1054 = vstv %s1053
        %v1055 = vmul.f32 %v1054, %v1052
        %v1056 = vadd.f32 %v1041, %v1055
        %v1057 = vld [vmem:[#allocation3 + $0x16] sm:$0x1]
        %1058 = vset.pattern.permute.xlu0 22
        %1059 = vperm.xlu0 %1058, %v725
        %v1060 = vpop.permute.xlu0 %1059
        %v1062 = vlaneseq
        %v1063 = vshrl.u32 %v1062, 7
        %v1064 = vsub.s32 0, %v1063
        %v1065 = vrot.slane %v1057, %v1064
        %v1066 = vadd.f32 %v1060, %v1065
        %v1067 = vtanh.pop %v1066
        %s1068 = sld [smem:[#allocation5 + $0x16]]
        %v1069 = vstv %s1068
        %v1070 = vmul.f32 %v1069, %v1067
        %v1071 = vadd.f32 %v1056, %v1070
        %v1072 = vld [vmem:[#allocation3 + $0x17] sm:$0x1]
        %1073 = vset.pattern.permute.xlu0 23
        %1074 = vperm.xlu0 %1073, %v725
        %v1075 = vpop.permute.xlu0 %1074
        %v1077 = vlaneseq
        %v1078 = vshrl.u32 %v1077, 7
        %v1079 = vsub.s32 0, %v1078
        %v1080 = vrot.slane %v1072, %v1079
        %v1081 = vadd.f32 %v1075, %v1080
        %v1082 = vtanh.pop %v1081
        %s1083 = sld [smem:[#allocation5 + $0x17]]
        %v1084 = vstv %s1083
        %v1085 = vmul.f32 %v1084, %v1082
        %v1086 = vadd.f32 %v1071, %v1085
        %v1087 = vld [vmem:[#allocation3 + $0x18] sm:$0x1]
        %1088 = vset.pattern.permute.xlu0 24
        %1089 = vperm.xlu0 %1088, %v725
        %v1090 = vpop.permute.xlu0 %1089
        %v1092 = vlaneseq
        %v1093 = vshrl.u32 %v1092, 7
        %v1094 = vsub.s32 0, %v1093
        %v1095 = vrot.slane %v1087, %v1094
        %v1096 = vadd.f32 %v1090, %v1095
        %v1097 = vtanh.pop %v1096
        %s1098 = sld [smem:[#allocation5 + $0x18]]
        %v1099 = vstv %s1098
        %v1100 = vmul.f32 %v1099, %v1097
        %v1101 = vadd.f32 %v1086, %v1100
        %v1102 = vld [vmem:[#allocation3 + $0x19] sm:$0x1]
        %1103 = vset.pattern.permute.xlu0 25
        %1104 = vperm.xlu0 %1103, %v725
        %v1105 = vpop.permute.xlu0 %1104
        %v1107 = vlaneseq
        %v1108 = vshrl.u32 %v1107, 7
        %v1109 = vsub.s32 0, %v1108
        %v1110 = vrot.slane %v1102, %v1109
        %v1111 = vadd.f32 %v1105, %v1110
        %v1112 = vtanh.pop %v1111
        %s1113 = sld [smem:[#allocation5 + $0x19]]
        %v1114 = vstv %s1113
        %v1115 = vmul.f32 %v1114, %v1112
        %v1116 = vadd.f32 %v1101, %v1115
        %v1117 = vld [vmem:[#allocation3 + $0x1a] sm:$0x1]
        %1118 = vset.pattern.permute.xlu0 26
        %1119 = vperm.xlu0 %1118, %v725
        %v1120 = vpop.permute.xlu0 %1119
        %v1122 = vlaneseq
        %v1123 = vshrl.u32 %v1122, 7
        %v1124 = vsub.s32 0, %v1123
        %v1125 = vrot.slane %v1117, %v1124
        %v1126 = vadd.f32 %v1120, %v1125
        %v1127 = vtanh.pop %v1126
        %s1128 = sld [smem:[#allocation5 + $0x1a]]
        %v1129 = vstv %s1128
        %v1130 = vmul.f32 %v1129, %v1127
        %v1131 = vadd.f32 %v1116, %v1130
        %v1132 = vld [vmem:[#allocation3 + $0x1b] sm:$0x1]
        %1133 = vset.pattern.permute.xlu0 27
        %1134 = vperm.xlu0 %1133, %v725
        %v1135 = vpop.permute.xlu0 %1134
        %v1137 = vlaneseq
        %v1138 = vshrl.u32 %v1137, 7
        %v1139 = vsub.s32 0, %v1138
        %v1140 = vrot.slane %v1132, %v1139
        %v1141 = vadd.f32 %v1135, %v1140
        %v1142 = vtanh.pop %v1141
        %s1143 = sld [smem:[#allocation5 + $0x1b]]
        %v1144 = vstv %s1143
        %v1145 = vmul.f32 %v1144, %v1142
        %v1146 = vadd.f32 %v1131, %v1145
        %v1147 = vld [vmem:[#allocation3 + $0x1c] sm:$0x1]
        %1148 = vset.pattern.permute.xlu0 28
        %1149 = vperm.xlu0 %1148, %v725
        %v1150 = vpop.permute.xlu0 %1149
        %v1152 = vlaneseq
        %v1153 = vshrl.u32 %v1152, 7
        %v1154 = vsub.s32 0, %v1153
        %v1155 = vrot.slane %v1147, %v1154
        %v1156 = vadd.f32 %v1150, %v1155
        %v1157 = vtanh.pop %v1156
        %s1158 = sld [smem:[#allocation5 + $0x1c]]
        %v1159 = vstv %s1158
        %v1160 = vmul.f32 %v1159, %v1157
        %v1161 = vadd.f32 %v1146, %v1160
        %v1162 = vld [vmem:[#allocation3 + $0x1d] sm:$0x1]
        %1163 = vset.pattern.permute.xlu0 29
        %1164 = vperm.xlu0 %1163, %v725
        %v1165 = vpop.permute.xlu0 %1164
        %v1167 = vlaneseq
        %v1168 = vshrl.u32 %v1167, 7
        %v1169 = vsub.s32 0, %v1168
        %v1170 = vrot.slane %v1162, %v1169
        %v1171 = vadd.f32 %v1165, %v1170
        %v1172 = vtanh.pop %v1171
        %s1173 = sld [smem:[#allocation5 + $0x1d]]
        %v1174 = vstv %s1173
        %v1175 = vmul.f32 %v1174, %v1172
        %v1176 = vadd.f32 %v1161, %v1175
        %v1177 = vld [vmem:[#allocation3 + $0x1e] sm:$0x1]
        %1178 = vset.pattern.permute.xlu0 30
        %1179 = vperm.xlu0 %1178, %v725
        %v1180 = vpop.permute.xlu0 %1179
        %v1182 = vlaneseq
        %v1183 = vshrl.u32 %v1182, 7
        %v1184 = vsub.s32 0, %v1183
        %v1185 = vrot.slane %v1177, %v1184
        %v1186 = vadd.f32 %v1180, %v1185
        %v1187 = vtanh.pop %v1186
        %s1188 = sld [smem:[#allocation5 + $0x1e]]
        %v1189 = vstv %s1188
        %v1190 = vmul.f32 %v1189, %v1187
        %v1191 = vadd.f32 %v1176, %v1190
        %v1192 = vld [vmem:[#allocation3 + $0x1f] sm:$0x1]
        %1193 = vset.pattern.permute.xlu0 31
        %1194 = vperm.xlu0 %1193, %v725
        %v1195 = vpop.permute.xlu0 %1194
        %v1197 = vlaneseq
        %v1198 = vshrl.u32 %v1197, 7
        %v1199 = vsub.s32 0, %v1198
        %v1200 = vrot.slane %v1192, %v1199
        %v1201 = vadd.f32 %v1195, %v1200
        %v1202 = vtanh.pop %v1201
        %s1203 = sld [smem:[#allocation5 + $0x1f]]
        %v1204 = vstv %s1203
        %v1205 = vmul.f32 %v1204, %v1202
        %v1206 = vadd.f32 %v1191, %v1205
        %v1207 = vstv %s724
        %v1208 = vadd.f32 %v1206, %v1207
        %v1209 = vsel %vm723, 1, 0
        %v1210 = vlaneseq
        %v1211 = vshrl.u32 %v1210, 7
        %v1212 = vsub.s32 0, %v1211
        %v1213 = vrot.slane %v1209, %v1212
        %vm1214 = vcmp.eq.s32.totalorder %v1213, 1
        %v1215 = vsel %vm1214, -1e+25, %v1208
        %v1216 = vld [vmem:[%s465] sm:$0xff]
        %vm1217 = vcmp.ne.s32.totalorder %v1216, 0
        %v1218 = vsel %vm1217, 1, 0
        %1219 = vset.pattern.permute.xlu0 0
        %1220 = vperm.xlu0 %1219, %v1218
        %v1221 = vpop.permute.xlu0 %1220
        %vm1222 = vcmp.eq.s32.totalorder %v1221, 1
        %v1223 = vsel %vm1222, 0.0, %v1215
        %1224 = vst [vmem:[%s435] sm:$0xff] %v1223
        %s1225 = sand.u32 %s273, 1
        %s1226 = scalar_lea.sflag [#allocation6], %s1225
        %s1227 = sand.u32 %s273, 1
        %s1228 = smul.addr %s1227, 8
        %s1229 = scalar_lea.vmem [#allocation8], %s1228
        // Predicated region
        $region61: #{_mask_aware_ssn_fuse_impl.1} parent=55 // pred_check
          %p1230 = pneg %p283
        $region62: #{_mask_aware_ssn_fuse_impl.1} parent=55 // pred_check_branch
          %1232 = sbr.rel (%p1230) target = $region64
        $region63: #{_mask_aware_ssn_fuse_impl.1} parent=55 // pred_region
          %s1234 = ssub.s32 128, 128
          %1235 = vsyncadd %s1226, %s1234
          %s1236 = sadd.s32 %s31, %s32
          %s1237 = sadd.s32 %s1236, %s30
          %s1238 = smul.addr %s1237, 128
          %s1239 = scalar_lea.hbm %s9, %s1238
          %s1241 = sshll.u32 %s1229, 4
          %s1242 = int_to_ptr.vmem [resolvable:$true] %s1241
          %1244 = dma.vmem_to_hbm [thread:$0]  %s1242, 128, %s1239, %s1226
        $region64: #{_mask_aware_ssn_fuse_impl.1} parent=55 // pred_fallthru
          _
      $region56: #{_mask_aware_ssn_fuse_impl.1} parent=5 // pred_fallthru
        _
      %p1245 = scmp.le.s32.totalorder 2, %s20
      // Predicated region
      $region65: #{_mask_aware_ssn_fuse_impl.1} parent=5 // pred_check
        %p1246 = pneg %p1245
      $region66: #{_mask_aware_ssn_fuse_impl.1} parent=5 // pred_check_branch
        %1248 = sbr.rel (%p1246) target = $region68
      $region67: #{_mask_aware_ssn_fuse_impl.1} parent=5 // pred_region
        %s1249 = ssub.s32 %s20, 2
        // Predicated region
        $region69: #{_mask_aware_ssn_fuse_impl.1} parent=67 // pred_check
          %p1250 = pneg %p289
        $region70: #{_mask_aware_ssn_fuse_impl.1} parent=67 // pred_check_branch
          %1252 = sbr.rel (%p1250) target = $region72
        $region71: #{_mask_aware_ssn_fuse_impl.1} parent=67 // pred_region
          %s1253 = sand.u32 %s274, 1
          %s1254 = scalar_lea.sflag [#allocation6], %s1253
          %s1255 = sand.u32 %s274, 1
          %s1256 = smul.addr %s1255, 8
          %s1257 = scalar_lea.vmem [#allocation8], %s1256
          %1258 = dma.done %s1254, 128
        $region72: #{_mask_aware_ssn_fuse_impl.1} parent=67 // pred_fallthru
          _
      $region68: #{_mask_aware_ssn_fuse_impl.1} parent=5 // pred_fallthru
        _
    $region6: #{_mask_aware_ssn_fuse_impl.1} parent=1 // loop_footer
      %s24 = sadd.s32 1, %s20
    $region7: #{_mask_aware_ssn_fuse_impl.1} parent=1 // loop_footer_branch
      %19 = sbr.rel target = $region3
    $region8: #{_mask_aware_ssn_fuse_impl.1} parent=1 // loop_exit
      _
    %1259 = vsyncpa [#allocation6], 1
    %s1260 = scalar_lea.sflag [#allocation6], 1
    %1261 = vsyncpa %s1260, 1
    %1262 = vsyncpa [#allocation7], 1
    %s1263 = scalar_lea.sflag [#allocation7], 1
    %1264 = vsyncpa %s1263, 1

</llo_original>
